<compile_context>
chip_gen: v6e
topology: v6e:2x2x1
jax: 0.10.0
libtpu: 0.0.40
codegen_flags: <defaults>
</compile_context>

<pallas_src>
import functools

import jax
import jax.numpy as jnp
from jax.experimental import pallas as pl
from jax.experimental.pallas import tpu as pltpu

FEAT = 1024            # per-backbone feature width (cat -> 2048 = fc2 fan-in)
COMBINED = 2 * FEAT
LANE = 128             # TPU lane width — output padded to a multiple of this


def _round_up(x, m):
    return ((x + m - 1) // m) * m


def two_inputs_kernel(x1_ref, x2_ref, w1_ref, b1_ref, w2_ref, b2_ref,
                      wfc1_ref, wfc2_ref, bfc_ref, o_ref):
    # Backbone matmuls: bf16 operands on the MXU, f32 accumulation.
    c = jnp.dot(x1_ref[...], w1_ref[...],
                preferred_element_type=jnp.float32) + b1_ref[...]
    f = jnp.dot(x2_ref[...], w2_ref[...],
                preferred_element_type=jnp.float32) + b2_ref[...]
    # ReLU in f32 (VPU), then cast back to bf16 to feed the MXU.
    hc = jnp.maximum(c, 0.0).astype(wfc1_ref.dtype)
    hf = jnp.maximum(f, 0.0).astype(wfc2_ref.dtype)
    # fc2(relu(cat(c, f))) == relu(c) @ Wfc[:1024] + relu(f) @ Wfc[1024:] + b
    # — concat replaced by a split matmul (no (B, 2048) copy / relayout).
    out = jnp.dot(hc, wfc1_ref[...], preferred_element_type=jnp.float32)
    out = out + jnp.dot(hf, wfc2_ref[...], preferred_element_type=jnp.float32)
    o_ref[...] = out + bfc_ref[...]


def prepare_params(w1, b1, w2, b2, wfc, bfc):
    """One-time weight prep: transpose to (in, out), bf16 cast, pad fc2's
    output dim to a multiple of 128 lanes, split wfc into the two concat halves.
    Run once; the per-call forward does no weight reshaping."""
    num_classes = wfc.shape[0]
    c_pad = _round_up(num_classes, LANE)
    wfc_t = wfc.T.astype(jnp.bfloat16)                               # (2048, C)
    wfc_t = jnp.pad(wfc_t, ((0, 0), (0, c_pad - num_classes)))       # (2048, C_pad)
    bfc_p = jnp.pad(bfc.astype(jnp.float32), (0, c_pad - num_classes))
    return dict(
        w1=w1.T.astype(jnp.bfloat16),                  # (D1, FEAT)
        b1=b1.astype(jnp.float32).reshape(1, FEAT),
        w2=w2.T.astype(jnp.bfloat16),                  # (D2, FEAT)
        b2=b2.astype(jnp.float32).reshape(1, FEAT),
        wfc1=wfc_t[:FEAT, :],                          # (FEAT, C_pad)
        wfc2=wfc_t[FEAT:, :],                          # (FEAT, C_pad)
        bfc=bfc_p.reshape(1, c_pad),                   # (1, C_pad)
    )


@functools.partial(jax.jit, static_argnames=("num_classes",))
def two_inputs_forward(x1, x2, params, *, num_classes):
    B, D1 = x1.shape
    _, D2 = x2.shape
    c_pad = params["wfc1"].shape[1]

    # Batch tile: >=8 (sublane multiple); cap at 256 to match the 2x256 MXU on
    # v6e/v7x. Batch is padded up to a multiple of the tile and sliced back.
    tile_b = min(256, _round_up(B, 8))
    b_pad = _round_up(B, tile_b)
    x1p = jnp.pad(x1.astype(jnp.bfloat16), ((0, b_pad - B), (0, 0)))
    x2p = jnp.pad(x2.astype(jnp.bfloat16), ((0, b_pad - B), (0, 0)))

    flops = 2 * b_pad * (D1 + D2) * FEAT + 2 * b_pad * COMBINED * c_pad
    bytes_accessed = (
        b_pad * (D1 + D2) * 2                 # bf16 activations in
        + (D1 + D2) * FEAT * 2                # bf16 backbone weights
        + COMBINED * c_pad * 2                # bf16 fc2 weights
        + (2 * FEAT + c_pad) * 4              # f32 biases
        + b_pad * c_pad * 4                   # f32 output
    )

    grid_spec = pltpu.PrefetchScalarGridSpec(
        num_scalar_prefetch=0,
        grid=(b_pad // tile_b,),
        in_specs=[
            pl.BlockSpec((tile_b, D1), lambda i: (i, 0)),    # x1 tile
            pl.BlockSpec((tile_b, D2), lambda i: (i, 0)),    # x2 tile
            pl.BlockSpec((D1, FEAT), lambda i: (0, 0)),      # w1 (resident)
            pl.BlockSpec((1, FEAT), lambda i: (0, 0)),       # b1
            pl.BlockSpec((D2, FEAT), lambda i: (0, 0)),      # w2 (resident)
            pl.BlockSpec((1, FEAT), lambda i: (0, 0)),       # b2
            pl.BlockSpec((FEAT, c_pad), lambda i: (0, 0)),   # wfc half 1
            pl.BlockSpec((FEAT, c_pad), lambda i: (0, 0)),   # wfc half 2
            pl.BlockSpec((1, c_pad), lambda i: (0, 0)),      # bfc
        ],
        out_specs=pl.BlockSpec((tile_b, c_pad), lambda i: (i, 0)),
    )

    out_padded = pl.pallas_call(
        two_inputs_kernel,
        out_shape=jax.ShapeDtypeStruct((b_pad, c_pad), jnp.float32),
        grid_spec=grid_spec,
        compiler_params=pltpu.CompilerParams(
            dimension_semantics=("parallel",),
            vmem_limit_bytes=32 * 1024 * 1024,
        ),
        cost_estimate=pl.CostEstimate(
            flops=flops, transcendentals=0, bytes_accessed=bytes_accessed),
    )(
        x1p, x2p,
        params["w1"], params["b1"],
        params["w2"], params["b2"],
        params["wfc1"], params["wfc2"], params["bfc"],
    )
    return out_padded[:B, :num_classes]


def _init_linear(key, out_f, in_f):
    # Deterministic PyTorch-style uniform init: U(-1/sqrt(fan_in), 1/sqrt(fan_in))
    kw, kb = jax.random.split(key)
    bound = 1.0 / jnp.sqrt(jnp.float32(in_f))
    w = jax.random.uniform(kw, (out_f, in_f), jnp.float32, -bound, bound)
    b = jax.random.uniform(kb, (out_f,), jnp.float32, -bound, bound)
    return w, b


if __name__ == "__main__":
    B = 2              # batch
    D1, D2 = 32, 32    # per-backbone input widths
    NUM_CLASSES = 16

    root = jax.random.PRNGKey(0)
    k_x1, k_x2, k_m1, k_m2, k_fc = jax.random.split(root, 5)

    x1 = jax.random.normal(k_x1, (B, D1), jnp.float32)
    x2 = jax.random.normal(k_x2, (B, D2), jnp.float32)

    w1, b1 = _init_linear(k_m1, FEAT, D1)                  # model1 ~ Linear(D1, 1024)
    w2, b2 = _init_linear(k_m2, FEAT, D2)                  # model2 ~ Linear(D2, 1024)
    wfc, bfc = _init_linear(k_fc, NUM_CLASSES, COMBINED)   # fc2 = Linear(2048, C)

    params = prepare_params(w1, b1, w2, b2, wfc, bfc)      # one-time prep
    out = two_inputs_forward(x1, x2, params, num_classes=NUM_CLASSES)
    out = jax.block_until_ready(out)
    assert out.shape == (B, NUM_CLASSES)

    # Reference 1: mirrors the kernel's bf16-operand / f32-accumulate numerics.
    x1b, x2b = x1.astype(jnp.bfloat16), x2.astype(jnp.bfloat16)
    c_r = jnp.dot(x1b, w1.T.astype(jnp.bfloat16),
                  preferred_element_type=jnp.float32) + b1
    f_r = jnp.dot(x2b, w2.T.astype(jnp.bfloat16),
                  preferred_element_type=jnp.float32) + b2
    h_r = jnp.maximum(jnp.concatenate([c_r, f_r], axis=1), 0.0).astype(jnp.bfloat16)
    ref_bf16 = jnp.dot(h_r, wfc.T.astype(jnp.bfloat16),
                       preferred_element_type=jnp.float32) + bfc
    assert jnp.allclose(out, ref_bf16, atol=2e-3, rtol=2e-3)

    # Reference 2: full-f32 PyTorch semantics (looser tol — bf16 quantization).
    combined_f32 = jnp.concatenate([x1 @ w1.T + b1, x2 @ w2.T + b2], axis=1)
    ref_f32 = jnp.maximum(combined_f32, 0.0) @ wfc.T + bfc
    assert jnp.allclose(out, ref_f32, atol=5e-2, rtol=5e-2)

    print("KERNEL_OK")
</pallas_src>

<mosaic_0001>
module attributes {stable_mosaic.version = 11 : i64} {
  func.func @two_inputs_kernel(%arg0: i32, %arg1: memref<8x32xbf16, #tpu.memory_space<vmem>>, %arg2: memref<8x32xbf16, #tpu.memory_space<vmem>>, %arg3: memref<32x1024xbf16, #tpu.memory_space<vmem>>, %arg4: memref<1x1024xf32, #tpu.memory_space<vmem>>, %arg5: memref<32x1024xbf16, #tpu.memory_space<vmem>>, %arg6: memref<1x1024xf32, #tpu.memory_space<vmem>>, %arg7: memref<1024x128xbf16, #tpu.memory_space<vmem>>, %arg8: memref<1024x128xbf16, #tpu.memory_space<vmem>>, %arg9: memref<1x128xf32, #tpu.memory_space<vmem>>, %arg10: memref<8x128xf32, #tpu.memory_space<vmem>>) attributes {dimension_semantics = [#tpu.dimension_semantics<parallel>], iteration_bounds = array<i64: 1>, scalar_prefetch = 0 : i64, scratch_operands = 0 : i64, tpu.core_type = #tpu.core_type<tc>, window_params = [{transform_indices = @transform_0, window_bounds = array<i64: 8, 32>}, {transform_indices = @transform_1, window_bounds = array<i64: 8, 32>}, {pipeline_mode = #tpu.pipeline_mode<synchronous>, transform_indices = @transform_2, window_bounds = array<i64: 32, 1024>}, {pipeline_mode = #tpu.pipeline_mode<synchronous>, transform_indices = @transform_3, window_bounds = array<i64: 1, 1024>}, {pipeline_mode = #tpu.pipeline_mode<synchronous>, transform_indices = @transform_4, window_bounds = array<i64: 32, 1024>}, {pipeline_mode = #tpu.pipeline_mode<synchronous>, transform_indices = @transform_5, window_bounds = array<i64: 1, 1024>}, {pipeline_mode = #tpu.pipeline_mode<synchronous>, transform_indices = @transform_6, window_bounds = array<i64: 1024, 128>}, {pipeline_mode = #tpu.pipeline_mode<synchronous>, transform_indices = @transform_7, window_bounds = array<i64: 1024, 128>}, {pipeline_mode = #tpu.pipeline_mode<synchronous>, transform_indices = @transform_8, window_bounds = array<i64: 1, 128>}, {transform_indices = @transform_9, window_bounds = array<i64: 8, 128>}]} {
    %c0 = arith.constant 0 : index
    %c0_0 = arith.constant 0 : index
    %0 = vector.load %arg1[%c0, %c0_0] : memref<8x32xbf16, #tpu.memory_space<vmem>>, vector<8x32xbf16>
    %c0_1 = arith.constant 0 : index
    %c0_2 = arith.constant 0 : index
    %1 = vector.load %arg3[%c0_1, %c0_2] : memref<32x1024xbf16, #tpu.memory_space<vmem>>, vector<32x1024xbf16>
    %cst = arith.constant dense<0.000000e+00> : vector<8x1024xf32>
    %2 = tpu.matmul %0, %1, %cst {dimension_numbers = #tpu.dot_dimension_numbers<[1], [0], [0], [1], [0, 0, 1, 1], [], []>} : vector<8x32xbf16>, vector<32x1024xbf16>, vector<8x1024xf32> -> vector<8x1024xf32>
    %c0_3 = arith.constant 0 : index
    %c0_4 = arith.constant 0 : index
    %3 = vector.load %arg4[%c0_3, %c0_4] : memref<1x1024xf32, #tpu.memory_space<vmem>>, vector<1x1024xf32>
    %4 = vector.broadcast %3 : vector<1x1024xf32> to vector<8x1024xf32>
    %5 = arith.addf %2, %4 : vector<8x1024xf32>
    %c0_5 = arith.constant 0 : index
    %c0_6 = arith.constant 0 : index
    %6 = vector.load %arg2[%c0_5, %c0_6] : memref<8x32xbf16, #tpu.memory_space<vmem>>, vector<8x32xbf16>
    %c0_7 = arith.constant 0 : index
    %c0_8 = arith.constant 0 : index
    %7 = vector.load %arg5[%c0_7, %c0_8] : memref<32x1024xbf16, #tpu.memory_space<vmem>>, vector<32x1024xbf16>
    %cst_9 = arith.constant dense<0.000000e+00> : vector<8x1024xf32>
    %8 = tpu.matmul %6, %7, %cst_9 {dimension_numbers = #tpu.dot_dimension_numbers<[1], [0], [0], [1], [0, 0, 1, 1], [], []>} : vector<8x32xbf16>, vector<32x1024xbf16>, vector<8x1024xf32> -> vector<8x1024xf32>
    %c0_10 = arith.constant 0 : index
    %c0_11 = arith.constant 0 : index
    %9 = vector.load %arg6[%c0_10, %c0_11] : memref<1x1024xf32, #tpu.memory_space<vmem>>, vector<1x1024xf32>
    %10 = vector.broadcast %9 : vector<1x1024xf32> to vector<8x1024xf32>
    %11 = arith.addf %8, %10 : vector<8x1024xf32>
    %cst_12 = arith.constant 0.000000e+00 : f32
    %12 = vector.broadcast %cst_12 : f32 to vector<8x1024xf32>
    %13 = arith.maximumf %5, %12 : vector<8x1024xf32>
    %14 = arith.truncf %13 : vector<8x1024xf32> to vector<8x1024xbf16>
    %cst_13 = arith.constant 0.000000e+00 : f32
    %15 = vector.broadcast %cst_13 : f32 to vector<8x1024xf32>
    %16 = arith.maximumf %11, %15 : vector<8x1024xf32>
    %17 = arith.truncf %16 : vector<8x1024xf32> to vector<8x1024xbf16>
    %c0_14 = arith.constant 0 : index
    %c0_15 = arith.constant 0 : index
    %18 = vector.load %arg7[%c0_14, %c0_15] : memref<1024x128xbf16, #tpu.memory_space<vmem>>, vector<1024x128xbf16>
    %cst_16 = arith.constant dense<0.000000e+00> : vector<8x128xf32>
    %19 = tpu.matmul %14, %18, %cst_16 {dimension_numbers = #tpu.dot_dimension_numbers<[1], [0], [0], [1], [0, 0, 1, 1], [], []>} : vector<8x1024xbf16>, vector<1024x128xbf16>, vector<8x128xf32> -> vector<8x128xf32>
    %c0_17 = arith.constant 0 : index
    %c0_18 = arith.constant 0 : index
    %20 = vector.load %arg8[%c0_17, %c0_18] : memref<1024x128xbf16, #tpu.memory_space<vmem>>, vector<1024x128xbf16>
    %cst_19 = arith.constant dense<0.000000e+00> : vector<8x128xf32>
    %21 = tpu.matmul %17, %20, %cst_19 {dimension_numbers = #tpu.dot_dimension_numbers<[1], [0], [0], [1], [0, 0, 1, 1], [], []>} : vector<8x1024xbf16>, vector<1024x128xbf16>, vector<8x128xf32> -> vector<8x128xf32>
    %22 = arith.addf %19, %21 : vector<8x128xf32>
    %c0_20 = arith.constant 0 : index
    %c0_21 = arith.constant 0 : index
    %23 = vector.load %arg9[%c0_20, %c0_21] : memref<1x128xf32, #tpu.memory_space<vmem>>, vector<1x128xf32>
    %24 = vector.broadcast %23 : vector<1x128xf32> to vector<8x128xf32>
    %25 = arith.addf %22, %24 : vector<8x128xf32>
    %c0_22 = arith.constant 0 : index
    %c0_23 = arith.constant 0 : index
    %26 = vector.load %arg10[%c0_22, %c0_23] : memref<8x128xf32, #tpu.memory_space<vmem>>, vector<8x128xf32>
    tpu.vector_store %arg10[%c0_22, %c0_23], %25 {strides = array<i32>} : memref<8x128xf32, #tpu.memory_space<vmem>>, vector<8x128xf32>,
    return
  }
  func.func @transform_0(%arg0: i32) -> (i32, i32) {
    %c0_i32 = arith.constant 0 : i32
    %c0_i32_0 = arith.constant 0 : i32
    return %arg0, %c0_i32 : i32, i32
  }
  func.func @transform_1(%arg0: i32) -> (i32, i32) {
    %c0_i32 = arith.constant 0 : i32
    %c0_i32_0 = arith.constant 0 : i32
    return %arg0, %c0_i32 : i32, i32
  }
  func.func @transform_2(%arg0: i32) -> (i32, i32) {
    %c0_i32 = arith.constant 0 : i32
    %c0_i32_0 = arith.constant 0 : i32
    %c0_i32_1 = arith.constant 0 : i32
    return %c0_i32, %c0_i32_0 : i32, i32
  }
  func.func @transform_3(%arg0: i32) -> (i32, i32) {
    %c0_i32 = arith.constant 0 : i32
    %c0_i32_0 = arith.constant 0 : i32
    %c0_i32_1 = arith.constant 0 : i32
    return %c0_i32, %c0_i32_0 : i32, i32
  }
  func.func @transform_4(%arg0: i32) -> (i32, i32) {
    %c0_i32 = arith.constant 0 : i32
    %c0_i32_0 = arith.constant 0 : i32
    %c0_i32_1 = arith.constant 0 : i32
    return %c0_i32, %c0_i32_0 : i32, i32
  }
  func.func @transform_5(%arg0: i32) -> (i32, i32) {
    %c0_i32 = arith.constant 0 : i32
    %c0_i32_0 = arith.constant 0 : i32
    %c0_i32_1 = arith.constant 0 : i32
    return %c0_i32, %c0_i32_0 : i32, i32
  }
  func.func @transform_6(%arg0: i32) -> (i32, i32) {
    %c0_i32 = arith.constant 0 : i32
    %c0_i32_0 = arith.constant 0 : i32
    %c0_i32_1 = arith.constant 0 : i32
    return %c0_i32, %c0_i32_0 : i32, i32
  }
  func.func @transform_7(%arg0: i32) -> (i32, i32) {
    %c0_i32 = arith.constant 0 : i32
    %c0_i32_0 = arith.constant 0 : i32
    %c0_i32_1 = arith.constant 0 : i32
    return %c0_i32, %c0_i32_0 : i32, i32
  }
  func.func @transform_8(%arg0: i32) -> (i32, i32) {
    %c0_i32 = arith.constant 0 : i32
    %c0_i32_0 = arith.constant 0 : i32
    %c0_i32_1 = arith.constant 0 : i32
    return %c0_i32, %c0_i32_0 : i32, i32
  }
  func.func @transform_9(%arg0: i32) -> (i32, i32) {
    %c0_i32 = arith.constant 0 : i32
    %c0_i32_0 = arith.constant 0 : i32
    return %arg0, %c0_i32 : i32, i32
  }
}

</mosaic_0001>

<llo_original>
// kernel: two_inputs_forward.1
$region0: #{two_inputs_forward.1}
  #allocation0 [shape = 'u32[]', space=smem, size = 0x4, offset = 0x4, fixed_abs, tag = 'smem constant byte address 0x4 - core index']
  #allocation1 [shape = 'u32[144,128]{1,0:T(1,128)}', space=vmem, size = 0x12000, scoped, tag = 'internal scratch']
  %s0 = inlined_call_operand.vmem [shape: bf16[8,32], index: 0, kind: input, shape index: {}]
  %s1 = inlined_call_operand.vmem [shape: bf16[8,32], index: 1, kind: input, shape index: {}]
  %s2 = inlined_call_operand.hbm [shape: bf16[32,1024], index: 2, kind: input, shape index: {}]
  %s3 = inlined_call_operand.vmem [shape: f32[1,1024], index: 3, kind: input, shape index: {}]
  %s4 = inlined_call_operand.hbm [shape: bf16[32,1024], index: 4, kind: input, shape index: {}]
  %s5 = inlined_call_operand.vmem [shape: f32[1,1024], index: 5, kind: input, shape index: {}]
  %s6 = inlined_call_operand.hbm [shape: bf16[1024,128], index: 6, kind: input, shape index: {}]
  %s7 = inlined_call_operand.hbm [shape: bf16[1024,128], index: 7, kind: input, shape index: {}]
  %s8 = inlined_call_operand.vmem [shape: f32[1,128], index: 8, kind: input, shape index: {}]
  %s9 = inlined_call_operand.vmem [shape: f32[8,128], index: 9, kind: output, shape index: {}]
  %s10 = sld [smem:[#allocation0]]
  $region62: #{two_inputs_forward.1} parent=0
    _
  %s12 = ssub.s32 1, %s10
  %s13 = scalar_select 0, %s12, %s10
  $region1: #{two_inputs_forward.1} parent=0
    #allocation2 [shape = 'u8[65536]{0}', space=vmem, size = 0x10000, scoped, tag = 'input window, operand 2, single buffered']
    #allocation3 [shape = 's32[1]{0}', space=sflag, size = 0x4, scoped, tag = 'scoped memory for two_inputs_forward.1']
    #allocation4 [shape = 'u8[65536]{0}', space=vmem, size = 0x10000, scoped, tag = 'input window, operand 4, single buffered']
    #allocation5 [shape = 's32[1]{0}', space=sflag, size = 0x4, scoped, tag = 'scoped memory for two_inputs_forward.1']
    #allocation6 [shape = 'u8[262144]{0}', space=vmem, size = 0x40000, scoped, tag = 'input window, operand 6, single buffered']
    #allocation7 [shape = 'u8[262144]{0}', space=vmem, size = 0x40000, scoped, tag = 'input window, operand 7, single buffered']
    #allocation8 [shape = 's32[1]{0}', space=sflag, size = 0x4, scoped, tag = 'scoped memory for two_inputs_forward.1']
    %14 = vsyncpa [#allocation3], 0
    %15 = vsyncpa [#allocation5], 0
    %16 = vsyncpa [#allocation8], 0
    // Predicated region
    $region2: #{two_inputs_forward.1} parent=1 // pred_check
      _
    $region3: #{two_inputs_forward.1} parent=1 // pred_check_branch
      %18 = sbr.rel (0) target = $region5
    $region4: #{two_inputs_forward.1} parent=1 // pred_region
      _
    $region5: #{two_inputs_forward.1} parent=1 // pred_fallthru
      _
    // Predicated region
    $region6: #{two_inputs_forward.1} parent=1 // pred_check
      _
    $region7: #{two_inputs_forward.1} parent=1 // pred_check_branch
      %20 = sbr.rel (0) target = $region9
    $region8: #{two_inputs_forward.1} parent=1 // pred_region
      _
    $region9: #{two_inputs_forward.1} parent=1 // pred_fallthru
      _
    // Predicated region
    $region10: #{two_inputs_forward.1} parent=1 // pred_check
      _
    $region11: #{two_inputs_forward.1} parent=1 // pred_check_branch
      %22 = sbr.rel (0) target = $region13
    $region12: #{two_inputs_forward.1} parent=1 // pred_region
      %s24 = ssub.s32 2048, 2048
      %25 = vsyncadd [#allocation3], %s24
      %s26 = sshll.u32 [#allocation2], 4
      %s27 = int_to_ptr.vmem [resolvable:$true] %s26
      %32 = dma.hbm_to_vmem [thread:$0]  %s2, 2048, %s27, [#allocation3], 512, 512, 32
    $region13: #{two_inputs_forward.1} parent=1 // pred_fallthru
      _
    // Predicated region
    $region14: #{two_inputs_forward.1} parent=1 // pred_check
      _
    $region15: #{two_inputs_forward.1} parent=1 // pred_check_branch
      %34 = sbr.rel (0) target = $region17
    $region16: #{two_inputs_forward.1} parent=1 // pred_region
      _
    $region17: #{two_inputs_forward.1} parent=1 // pred_fallthru
      _
    // Predicated region
    $region18: #{two_inputs_forward.1} parent=1 // pred_check
      _
    $region19: #{two_inputs_forward.1} parent=1 // pred_check_branch
      %36 = sbr.rel (0) target = $region21
    $region20: #{two_inputs_forward.1} parent=1 // pred_region
      %s38 = ssub.s32 2048, 2048
      %39 = vsyncadd [#allocation5], %s38
      %s40 = sshll.u32 [#allocation4], 4
      %s41 = int_to_ptr.vmem [resolvable:$true] %s40
      %46 = dma.hbm_to_vmem [thread:$0]  %s4, 2048, %s41, [#allocation5], 512, 512, 32
    $region21: #{two_inputs_forward.1} parent=1 // pred_fallthru
      _
    // Predicated region
    $region22: #{two_inputs_forward.1} parent=1 // pred_check
      _
    $region23: #{two_inputs_forward.1} parent=1 // pred_check_branch
      %48 = sbr.rel (0) target = $region25
    $region24: #{two_inputs_forward.1} parent=1 // pred_region
      _
    $region25: #{two_inputs_forward.1} parent=1 // pred_fallthru
      _
    // Predicated region
    $region26: #{two_inputs_forward.1} parent=1 // pred_check
      _
    $region27: #{two_inputs_forward.1} parent=1 // pred_check_branch
      %50 = sbr.rel (0) target = $region29
    $region28: #{two_inputs_forward.1} parent=1 // pred_region
      %s52 = ssub.s32 8192, 8192
      %53 = vsyncadd [#allocation5], %s52
      %s54 = sshll.u32 [#allocation6], 4
      %s55 = int_to_ptr.vmem [resolvable:$true] %s54
      %60 = dma.hbm_to_vmem [thread:$0]  %s6, 8192, %s55, [#allocation5], 64, 64, 4
    $region29: #{two_inputs_forward.1} parent=1 // pred_fallthru
      _
    // Predicated region
    $region30: #{two_inputs_forward.1} parent=1 // pred_check
      _
    $region31: #{two_inputs_forward.1} parent=1 // pred_check_branch
      %62 = sbr.rel (0) target = $region33
    $region32: #{two_inputs_forward.1} parent=1 // pred_region
      %s64 = ssub.s32 8192, 8192
      %65 = vsyncadd [#allocation8], %s64
      %s66 = sshll.u32 [#allocation7], 4
      %s67 = int_to_ptr.vmem [resolvable:$true] %s66
      %72 = dma.hbm_to_vmem [thread:$0]  %s7, 8192, %s67, [#allocation8], 64, 64, 4
    $region33: #{two_inputs_forward.1} parent=1 // pred_fallthru
      _
    // Predicated region
    $region34: #{two_inputs_forward.1} parent=1 // pred_check
      _
    $region35: #{two_inputs_forward.1} parent=1 // pred_check_branch
      %74 = sbr.rel (0) target = $region37
    $region36: #{two_inputs_forward.1} parent=1 // pred_region
      _
    $region37: #{two_inputs_forward.1} parent=1 // pred_fallthru
      _
    // Predicated region
    $region38: #{two_inputs_forward.1} parent=1 // pred_check
      _
    $region39: #{two_inputs_forward.1} parent=1 // pred_check_branch
      %76 = sbr.rel (0) target = $region41
    $region40: #{two_inputs_forward.1} parent=1 // pred_region
      %77 = dma.done [#allocation3], 2048
    $region41: #{two_inputs_forward.1} parent=1 // pred_fallthru
      _
    // Predicated region
    $region42: #{two_inputs_forward.1} parent=1 // pred_check
      _
    $region43: #{two_inputs_forward.1} parent=1 // pred_check_branch
      %79 = sbr.rel (0) target = $region45
    $region44: #{two_inputs_forward.1} parent=1 // pred_region
      %80 = dma.done [#allocation5], 2048
    $region45: #{two_inputs_forward.1} parent=1 // pred_fallthru
      _
    // Predicated region
    $region46: #{two_inputs_forward.1} parent=1 // pred_check
      _
    $region47: #{two_inputs_forward.1} parent=1 // pred_check_branch
      %82 = sbr.rel (0) target = $region49
    $region48: #{two_inputs_forward.1} parent=1 // pred_region
      %83 = dma.done [#allocation5], 8192
    $region49: #{two_inputs_forward.1} parent=1 // pred_fallthru
      _
    // Predicated region
    $region50: #{two_inputs_forward.1} parent=1 // pred_check
      _
    $region51: #{two_inputs_forward.1} parent=1 // pred_check_branch
      %85 = sbr.rel (0) target = $region53
    $region52: #{two_inputs_forward.1} parent=1 // pred_region
      %86 = dma.done [#allocation8], 8192
    $region53: #{two_inputs_forward.1} parent=1 // pred_fallthru
      _
    %v88 = vld [vmem:[%s0] sm:$0xf]
    %v89 = vld [vmem:[#allocation2] sm:$0xff]
    %v90 = vld [vmem:[#allocation2 + $0x8] sm:$0xff]
    %v91 = vld [vmem:[#allocation2 + $0x10] sm:$0xff]
    %v92 = vld [vmem:[#allocation2 + $0x18] sm:$0xff]
    %v93 = vld [vmem:[#allocation2 + $0x20] sm:$0xff]
    %v94 = vld [vmem:[#allocation2 + $0x28] sm:$0xff]
    %v95 = vld [vmem:[#allocation2 + $0x30] sm:$0xff]
    %v96 = vld [vmem:[#allocation2 + $0x38] sm:$0xff]
    %v97 = vld [vmem:[#allocation2 + $0x40] sm:$0xff]
    %v98 = vld [vmem:[#allocation2 + $0x48] sm:$0xff]
    %v99 = vld [vmem:[#allocation2 + $0x50] sm:$0xff]
    %v100 = vld [vmem:[#allocation2 + $0x58] sm:$0xff]
    %v101 = vld [vmem:[#allocation2 + $0x60] sm:$0xff]
    %v102 = vld [vmem:[#allocation2 + $0x68] sm:$0xff]
    %v103 = vld [vmem:[#allocation2 + $0x70] sm:$0xff]
    %v104 = vld [vmem:[#allocation2 + $0x78] sm:$0xff]
    %v105 = vld [vmem:[%s3] sm:$0xff]
    %v107 = vlaneseq
    %v108 = vshrl.u32 %v107, 7
    %v109 = vsub.s32 0, %v108
    %v110 = vrot.slane %v105, %v109
    %v111 = vlaneseq
    %v112 = vshrl.u32 %v111, 7
    %v113 = vsub.s32 1, %v112
    %v114 = vrot.slane %v105, %v113
    %v115 = vlaneseq
    %v116 = vshrl.u32 %v115, 7
    %v117 = vsub.s32 2, %v116
    %v118 = vrot.slane %v105, %v117
    %v119 = vlaneseq
    %v120 = vshrl.u32 %v119, 7
    %v121 = vsub.s32 3, %v120
    %v122 = vrot.slane %v105, %v121
    %v123 = vlaneseq
    %v124 = vshrl.u32 %v123, 7
    %v125 = vsub.s32 4, %v124
    %v126 = vrot.slane %v105, %v125
    %v127 = vlaneseq
    %v128 = vshrl.u32 %v127, 7
    %v129 = vsub.s32 5, %v128
    %v130 = vrot.slane %v105, %v129
    %v131 = vlaneseq
    %v132 = vshrl.u32 %v131, 7
    %v133 = vsub.s32 6, %v132
    %v134 = vrot.slane %v105, %v133
    %v135 = vlaneseq
    %v136 = vshrl.u32 %v135, 7
    %v137 = vsub.s32 7, %v136
    %v138 = vrot.slane %v105, %v137
    %v163 = vunpack.c.l.b16 %v89
    %v164 = vunpack.c.h.b16 %v89
    %v165 = vunpack.c.l.b16 %v90
    %v166 = vunpack.c.h.b16 %v90
    %v167 = vunpack.c.l.b16 %v91
    %v168 = vunpack.c.h.b16 %v91
    %v169 = vunpack.c.l.b16 %v92
    %v170 = vunpack.c.h.b16 %v92
    %v171 = vunpack.c.l.b16 %v93
    %v172 = vunpack.c.h.b16 %v93
    %v173 = vunpack.c.l.b16 %v94
    %v174 = vunpack.c.h.b16 %v94
    %v175 = vunpack.c.l.b16 %v95
    %v176 = vunpack.c.h.b16 %v95
    %v177 = vunpack.c.l.b16 %v96
    %v178 = vunpack.c.h.b16 %v96
    %v179 = vunpack.c.l.b16 %v97
    %v180 = vunpack.c.h.b16 %v97
    %v181 = vunpack.c.l.b16 %v98
    %v182 = vunpack.c.h.b16 %v98
    %v183 = vunpack.c.l.b16 %v99
    %v184 = vunpack.c.h.b16 %v99
    %v185 = vunpack.c.l.b16 %v100
    %v186 = vunpack.c.h.b16 %v100
    %v187 = vunpack.c.l.b16 %v101
    %v188 = vunpack.c.h.b16 %v101
    %v189 = vunpack.c.l.b16 %v102
    %v190 = vunpack.c.h.b16 %v102
    %v191 = vunpack.c.l.b16 %v103
    %v192 = vunpack.c.h.b16 %v103
    %v193 = vunpack.c.l.b16 %v104
    %v194 = vunpack.c.h.b16 %v104
    %v195 = vpack.c.b16 %v171, %v163
    %v196 = vpack.c.b16 %v172, %v164
    %v197 = vpack.c.b16 %v173, %v165
    %v198 = vpack.c.b16 %v174, %v166
    %v199 = vpack.c.b16 %v175, %v167
    %v200 = vpack.c.b16 %v176, %v168
    %v201 = vpack.c.b16 %v177, %v169
    %v202 = vpack.c.b16 %v178, %v170
    %v203 = vpack.c.b16 %v187, %v179
    %v204 = vpack.c.b16 %v188, %v180
    %v205 = vpack.c.b16 %v189, %v181
    %v206 = vpack.c.b16 %v190, %v182
    %v207 = vpack.c.b16 %v191, %v183
    %v208 = vpack.c.b16 %v192, %v184
    %v209 = vpack.c.b16 %v193, %v185
    %v210 = vpack.c.b16 %v194, %v186
    %vm227 = vcmask 261120
    %v229 = vsel %vm227, %v88, 0
    %231 = vmatprep.subr.bf16.mxu0 0
    %232 = vmatpush1.bf16.msra.mxu0 0
    %233 = vmatprep.subr.bf16.mxu0 0
    %234 = vmatpush1.bf16.msra.mxu0 0
    %235 = vmatprep.subr.bf16.mxu0 0
    %236 = vmatpush1.bf16.msra.mxu0 0
    %237 = vmatprep.subr.bf16.mxu0 0
    %238 = vmatpush1.bf16.msra.mxu0 0
    %239 = vmatprep.subr.bf16.mxu0 0
    %240 = vmatpush1.bf16.msra.mxu0 0
    %241 = vmatprep.subr.bf16.mxu0 0
    %242 = vmatpush1.bf16.msra.mxu0 0
    %243 = vmatprep.subr.bf16.mxu0 %v204
    %244 = vmatpush1.bf16.msra.mxu0 %v203
    %245 = vmatprep.subr.bf16.mxu0 %v196
    %246 = vmatpush1.bf16.msra.mxu0 %v195
    %247 = vmatprep.subr.bf16.mxu0 0
    %248 = vmatpush2.bf16.msra.mxu0 0
    %249 = vmatprep.subr.bf16.mxu0 0
    %250 = vmatpush2.bf16.msra.mxu0 0
    %251 = vmatprep.subr.bf16.mxu0 0
    %252 = vmatpush2.bf16.msra.mxu0 0
    %253 = vmatprep.subr.bf16.mxu0 0
    %254 = vmatpush2.bf16.msra.mxu0 0
    %255 = vmatprep.subr.bf16.mxu0 0
    %256 = vmatpush2.bf16.msra.mxu0 0
    %257 = vmatprep.subr.bf16.mxu0 0
    %258 = vmatpush2.bf16.msra.mxu0 0
    %259 = vmatprep.subr.bf16.mxu0 0
    %260 = vmatpush2.bf16.msra.mxu0 0
    %261 = vmatprep.subr.bf16.mxu0 0
    %262 = vmatpush2.bf16.msra.mxu0 0
    %263 = vmatprep.mubr.bf16.mxu0 0
    %264 = vmatmul.mubr.bf16.gmra.mxu0 %v229
    %v265 = vpop.f32.mrf.mxu0
    %v266 = vadd.f32 %v110, %v265
    %v267 = vpop.f32.mrf.mxu0
    %v268 = vadd.f32 %v114, %v267
    %v269 = vpop.f32.mrf.mxu0
    %v270 = vpop.f32.mrf.mxu0
    %271 = vdwg.mxu0
    %272 = vmatprep.subr.bf16.mxu0 0
    %273 = vmatpush1.bf16.msra.mxu0 0
    %274 = vmatprep.subr.bf16.mxu0 0
    %275 = vmatpush1.bf16.msra.mxu0 0
    %276 = vmatprep.subr.bf16.mxu0 0
    %277 = vmatpush1.bf16.msra.mxu0 0
    %278 = vmatprep.subr.bf16.mxu0 0
    %279 = vmatpush1.bf16.msra.mxu0 0
    %280 = vmatprep.subr.bf16.mxu0 0
    %281 = vmatpush1.bf16.msra.mxu0 0
    %282 = vmatprep.subr.bf16.mxu0 0
    %283 = vmatpush1.bf16.msra.mxu0 0
    %284 = vmatprep.subr.bf16.mxu0 %v206
    %285 = vmatpush1.bf16.msra.mxu0 %v205
    %286 = vmatprep.subr.bf16.mxu0 %v198
    %287 = vmatpush1.bf16.msra.mxu0 %v197
    %288 = vmatprep.subr.bf16.mxu0 0
    %289 = vmatpush2.bf16.msra.mxu0 0
    %290 = vmatprep.subr.bf16.mxu0 0
    %291 = vmatpush2.bf16.msra.mxu0 0
    %292 = vmatprep.subr.bf16.mxu0 0
    %293 = vmatpush2.bf16.msra.mxu0 0
    %294 = vmatprep.subr.bf16.mxu0 0
    %295 = vmatpush2.bf16.msra.mxu0 0
    %296 = vmatprep.subr.bf16.mxu0 0
    %297 = vmatpush2.bf16.msra.mxu0 0
    %298 = vmatprep.subr.bf16.mxu0 0
    %299 = vmatpush2.bf16.msra.mxu0 0
    %300 = vmatprep.subr.bf16.mxu0 0
    %301 = vmatpush2.bf16.msra.mxu0 0
    %302 = vmatprep.subr.bf16.mxu0 0
    %303 = vmatpush2.bf16.msra.mxu0 0
    %304 = vmatprep.mubr.bf16.mxu0 0
    %305 = vmatmul.mubr.bf16.gmra.mxu0 %v229
    %v306 = vpop.f32.mrf.mxu0
    %v307 = vadd.f32 %v118, %v306
    %v308 = vpop.f32.mrf.mxu0
    %v309 = vadd.f32 %v122, %v308
    %v310 = vpop.f32.mrf.mxu0
    %v311 = vpop.f32.mrf.mxu0
    %312 = vdwg.mxu0
    %313 = vmatprep.subr.bf16.mxu0 0
    %314 = vmatpush1.bf16.msra.mxu0 0
    %315 = vmatprep.subr.bf16.mxu0 0
    %316 = vmatpush1.bf16.msra.mxu0 0
    %317 = vmatprep.subr.bf16.mxu0 0
    %318 = vmatpush1.bf16.msra.mxu0 0
    %319 = vmatprep.subr.bf16.mxu0 0
    %320 = vmatpush1.bf16.msra.mxu0 0
    %321 = vmatprep.subr.bf16.mxu0 0
    %322 = vmatpush1.bf16.msra.mxu0 0
    %323 = vmatprep.subr.bf16.mxu0 0
    %324 = vmatpush1.bf16.msra.mxu0 0
    %325 = vmatprep.subr.bf16.mxu0 %v208
    %326 = vmatpush1.bf16.msra.mxu0 %v207
    %327 = vmatprep.subr.bf16.mxu0 %v200
    %328 = vmatpush1.bf16.msra.mxu0 %v199
    %329 = vmatprep.subr.bf16.mxu0 0
    %330 = vmatpush2.bf16.msra.mxu0 0
    %331 = vmatprep.subr.bf16.mxu0 0
    %332 = vmatpush2.bf16.msra.mxu0 0
    %333 = vmatprep.subr.bf16.mxu0 0
    %334 = vmatpush2.bf16.msra.mxu0 0
    %335 = vmatprep.subr.bf16.mxu0 0
    %336 = vmatpush2.bf16.msra.mxu0 0
    %337 = vmatprep.subr.bf16.mxu0 0
    %338 = vmatpush2.bf16.msra.mxu0 0
    %339 = vmatprep.subr.bf16.mxu0 0
    %340 = vmatpush2.bf16.msra.mxu0 0
    %341 = vmatprep.subr.bf16.mxu0 0
    %342 = vmatpush2.bf16.msra.mxu0 0
    %343 = vmatprep.subr.bf16.mxu0 0
    %344 = vmatpush2.bf16.msra.mxu0 0
    %345 = vmatprep.mubr.bf16.mxu0 0
    %346 = vmatmul.mubr.bf16.gmra.mxu0 %v229
    %v347 = vpop.f32.mrf.mxu0
    %v348 = vadd.f32 %v126, %v347
    %v349 = vpop.f32.mrf.mxu0
    %v350 = vadd.f32 %v130, %v349
    %v351 = vpop.f32.mrf.mxu0
    %v352 = vpop.f32.mrf.mxu0
    %353 = vdwg.mxu0
    %354 = vmatprep.subr.bf16.mxu0 0
    %355 = vmatpush1.bf16.msra.mxu0 0
    %356 = vmatprep.subr.bf16.mxu0 0
    %357 = vmatpush1.bf16.msra.mxu0 0
    %358 = vmatprep.subr.bf16.mxu0 0
    %359 = vmatpush1.bf16.msra.mxu0 0
    %360 = vmatprep.subr.bf16.mxu0 0
    %361 = vmatpush1.bf16.msra.mxu0 0
    %362 = vmatprep.subr.bf16.mxu0 0
    %363 = vmatpush1.bf16.msra.mxu0 0
    %364 = vmatprep.subr.bf16.mxu0 0
    %365 = vmatpush1.bf16.msra.mxu0 0
    %366 = vmatprep.subr.bf16.mxu0 %v210
    %367 = vmatpush1.bf16.msra.mxu0 %v209
    %368 = vmatprep.subr.bf16.mxu0 %v202
    %369 = vmatpush1.bf16.msra.mxu0 %v201
    %370 = vmatprep.subr.bf16.mxu0 0
    %371 = vmatpush2.bf16.msra.mxu0 0
    %372 = vmatprep.subr.bf16.mxu0 0
    %373 = vmatpush2.bf16.msra.mxu0 0
    %374 = vmatprep.subr.bf16.mxu0 0
    %375 = vmatpush2.bf16.msra.mxu0 0
    %376 = vmatprep.subr.bf16.mxu0 0
    %377 = vmatpush2.bf16.msra.mxu0 0
    %378 = vmatprep.subr.bf16.mxu0 0
    %379 = vmatpush2.bf16.msra.mxu0 0
    %380 = vmatprep.subr.bf16.mxu0 0
    %381 = vmatpush2.bf16.msra.mxu0 0
    %382 = vmatprep.subr.bf16.mxu0 0
    %383 = vmatpush2.bf16.msra.mxu0 0
    %384 = vmatprep.subr.bf16.mxu0 0
    %385 = vmatpush2.bf16.msra.mxu0 0
    %386 = vmatprep.mubr.bf16.mxu0 0
    %387 = vmatmul.mubr.bf16.gmra.mxu0 %v229
    %v388 = vpop.f32.mrf.mxu0
    %v389 = vadd.f32 %v134, %v388
    %v390 = vpop.f32.mrf.mxu0
    %v391 = vadd.f32 %v138, %v390
    %v392 = vpop.f32.mrf.mxu0
    %v393 = vpop.f32.mrf.mxu0
    %394 = vdwg.mxu0
    %v395 = vld [vmem:[%s1] sm:$0xf]
    %v396 = vld [vmem:[#allocation4] sm:$0xff]
    %v397 = vld [vmem:[#allocation4 + $0x8] sm:$0xff]
    %v398 = vld [vmem:[#allocation4 + $0x10] sm:$0xff]
    %v399 = vld [vmem:[#allocation4 + $0x18] sm:$0xff]
    %v400 = vld [vmem:[#allocation4 + $0x20] sm:$0xff]
    %v401 = vld [vmem:[#allocation4 + $0x28] sm:$0xff]
    %v402 = vld [vmem:[#allocation4 + $0x30] sm:$0xff]
    %v403 = vld [vmem:[#allocation4 + $0x38] sm:$0xff]
    %v404 = vld [vmem:[#allocation4 + $0x40] sm:$0xff]
    %v405 = vld [vmem:[#allocation4 + $0x48] sm:$0xff]
    %v406 = vld [vmem:[#allocation4 + $0x50] sm:$0xff]
    %v407 = vld [vmem:[#allocation4 + $0x58] sm:$0xff]
    %v408 = vld [vmem:[#allocation4 + $0x60] sm:$0xff]
    %v409 = vld [vmem:[#allocation4 + $0x68] sm:$0xff]
    %v410 = vld [vmem:[#allocation4 + $0x70] sm:$0xff]
    %v411 = vld [vmem:[#allocation4 + $0x78] sm:$0xff]
    %v412 = vld [vmem:[%s5] sm:$0xff]
    %v414 = vlaneseq
    %v415 = vshrl.u32 %v414, 7
    %v416 = vsub.s32 0, %v415
    %v417 = vrot.slane %v412, %v416
    %v418 = vlaneseq
    %v419 = vshrl.u32 %v418, 7
    %v420 = vsub.s32 1, %v419
    %v421 = vrot.slane %v412, %v420
    %v422 = vlaneseq
    %v423 = vshrl.u32 %v422, 7
    %v424 = vsub.s32 2, %v423
    %v425 = vrot.slane %v412, %v424
    %v426 = vlaneseq
    %v427 = vshrl.u32 %v426, 7
    %v428 = vsub.s32 3, %v427
    %v429 = vrot.slane %v412, %v428
    %v430 = vlaneseq
    %v431 = vshrl.u32 %v430, 7
    %v432 = vsub.s32 4, %v431
    %v433 = vrot.slane %v412, %v432
    %v434 = vlaneseq
    %v435 = vshrl.u32 %v434, 7
    %v436 = vsub.s32 5, %v435
    %v437 = vrot.slane %v412, %v436
    %v438 = vlaneseq
    %v439 = vshrl.u32 %v438, 7
    %v440 = vsub.s32 6, %v439
    %v441 = vrot.slane %v412, %v440
    %v442 = vlaneseq
    %v443 = vshrl.u32 %v442, 7
    %v444 = vsub.s32 7, %v443
    %v445 = vrot.slane %v412, %v444
    %v470 = vunpack.c.l.b16 %v396
    %v471 = vunpack.c.h.b16 %v396
    %v472 = vunpack.c.l.b16 %v397
    %v473 = vunpack.c.h.b16 %v397
    %v474 = vunpack.c.l.b16 %v398
    %v475 = vunpack.c.h.b16 %v398
    %v476 = vunpack.c.l.b16 %v399
    %v477 = vunpack.c.h.b16 %v399
    %v478 = vunpack.c.l.b16 %v400
    %v479 = vunpack.c.h.b16 %v400
    %v480 = vunpack.c.l.b16 %v401
    %v481 = vunpack.c.h.b16 %v401
    %v482 = vunpack.c.l.b16 %v402
    %v483 = vunpack.c.h.b16 %v402
    %v484 = vunpack.c.l.b16 %v403
    %v485 = vunpack.c.h.b16 %v403
    %v486 = vunpack.c.l.b16 %v404
    %v487 = vunpack.c.h.b16 %v404
    %v488 = vunpack.c.l.b16 %v405
    %v489 = vunpack.c.h.b16 %v405
    %v490 = vunpack.c.l.b16 %v406
    %v491 = vunpack.c.h.b16 %v406
    %v492 = vunpack.c.l.b16 %v407
    %v493 = vunpack.c.h.b16 %v407
    %v494 = vunpack.c.l.b16 %v408
    %v495 = vunpack.c.h.b16 %v408
    %v496 = vunpack.c.l.b16 %v409
    %v497 = vunpack.c.h.b16 %v409
    %v498 = vunpack.c.l.b16 %v410
    %v499 = vunpack.c.h.b16 %v410
    %v500 = vunpack.c.l.b16 %v411
    %v501 = vunpack.c.h.b16 %v411
    %v502 = vpack.c.b16 %v478, %v470
    %v503 = vpack.c.b16 %v479, %v471
    %v504 = vpack.c.b16 %v480, %v472
    %v505 = vpack.c.b16 %v481, %v473
    %v506 = vpack.c.b16 %v482, %v474
    %v507 = vpack.c.b16 %v483, %v475
    %v508 = vpack.c.b16 %v484, %v476
    %v509 = vpack.c.b16 %v485, %v477
    %v510 = vpack.c.b16 %v494, %v486
    %v511 = vpack.c.b16 %v495, %v487
    %v512 = vpack.c.b16 %v496, %v488
    %v513 = vpack.c.b16 %v497, %v489
    %v514 = vpack.c.b16 %v498, %v490
    %v515 = vpack.c.b16 %v499, %v491
    %v516 = vpack.c.b16 %v500, %v492
    %v517 = vpack.c.b16 %v501, %v493
    %v535 = vsel %vm227, %v395, 0
    %537 = vmatprep.subr.bf16.mxu0 0
    %538 = vmatpush1.bf16.msra.mxu0 0
    %539 = vmatprep.subr.bf16.mxu0 0
    %540 = vmatpush1.bf16.msra.mxu0 0
    %541 = vmatprep.subr.bf16.mxu0 0
    %542 = vmatpush1.bf16.msra.mxu0 0
    %543 = vmatprep.subr.bf16.mxu0 0
    %544 = vmatpush1.bf16.msra.mxu0 0
    %545 = vmatprep.subr.bf16.mxu0 0
    %546 = vmatpush1.bf16.msra.mxu0 0
    %547 = vmatprep.subr.bf16.mxu0 0
    %548 = vmatpush1.bf16.msra.mxu0 0
    %549 = vmatprep.subr.bf16.mxu0 %v511
    %550 = vmatpush1.bf16.msra.mxu0 %v510
    %551 = vmatprep.subr.bf16.mxu0 %v503
    %552 = vmatpush1.bf16.msra.mxu0 %v502
    %553 = vmatprep.subr.bf16.mxu0 0
    %554 = vmatpush2.bf16.msra.mxu0 0
    %555 = vmatprep.subr.bf16.mxu0 0
    %556 = vmatpush2.bf16.msra.mxu0 0
    %557 = vmatprep.subr.bf16.mxu0 0
    %558 = vmatpush2.bf16.msra.mxu0 0
    %559 = vmatprep.subr.bf16.mxu0 0
    %560 = vmatpush2.bf16.msra.mxu0 0
    %561 = vmatprep.subr.bf16.mxu0 0
    %562 = vmatpush2.bf16.msra.mxu0 0
    %563 = vmatprep.subr.bf16.mxu0 0
    %564 = vmatpush2.bf16.msra.mxu0 0
    %565 = vmatprep.subr.bf16.mxu0 0
    %566 = vmatpush2.bf16.msra.mxu0 0
    %567 = vmatprep.subr.bf16.mxu0 0
    %568 = vmatpush2.bf16.msra.mxu0 0
    %569 = vmatprep.mubr.bf16.mxu0 0
    %570 = vmatmul.mubr.bf16.gmra.mxu0 %v535
    %v571 = vpop.f32.mrf.mxu0
    %v572 = vadd.f32 %v417, %v571
    %v573 = vpop.f32.mrf.mxu0
    %v574 = vadd.f32 %v421, %v573
    %v575 = vpop.f32.mrf.mxu0
    %v576 = vpop.f32.mrf.mxu0
    %577 = vdwg.mxu0
    %578 = vmatprep.subr.bf16.mxu0 0
    %579 = vmatpush1.bf16.msra.mxu0 0
    %580 = vmatprep.subr.bf16.mxu0 0
    %581 = vmatpush1.bf16.msra.mxu0 0
    %582 = vmatprep.subr.bf16.mxu0 0
    %583 = vmatpush1.bf16.msra.mxu0 0
    %584 = vmatprep.subr.bf16.mxu0 0
    %585 = vmatpush1.bf16.msra.mxu0 0
    %586 = vmatprep.subr.bf16.mxu0 0
    %587 = vmatpush1.bf16.msra.mxu0 0
    %588 = vmatprep.subr.bf16.mxu0 0
    %589 = vmatpush1.bf16.msra.mxu0 0
    %590 = vmatprep.subr.bf16.mxu0 %v513
    %591 = vmatpush1.bf16.msra.mxu0 %v512
    %592 = vmatprep.subr.bf16.mxu0 %v505
    %593 = vmatpush1.bf16.msra.mxu0 %v504
    %594 = vmatprep.subr.bf16.mxu0 0
    %595 = vmatpush2.bf16.msra.mxu0 0
    %596 = vmatprep.subr.bf16.mxu0 0
    %597 = vmatpush2.bf16.msra.mxu0 0
    %598 = vmatprep.subr.bf16.mxu0 0
    %599 = vmatpush2.bf16.msra.mxu0 0
    %600 = vmatprep.subr.bf16.mxu0 0
    %601 = vmatpush2.bf16.msra.mxu0 0
    %602 = vmatprep.subr.bf16.mxu0 0
    %603 = vmatpush2.bf16.msra.mxu0 0
    %604 = vmatprep.subr.bf16.mxu0 0
    %605 = vmatpush2.bf16.msra.mxu0 0
    %606 = vmatprep.subr.bf16.mxu0 0
    %607 = vmatpush2.bf16.msra.mxu0 0
    %608 = vmatprep.subr.bf16.mxu0 0
    %609 = vmatpush2.bf16.msra.mxu0 0
    %610 = vmatprep.mubr.bf16.mxu0 0
    %611 = vmatmul.mubr.bf16.gmra.mxu0 %v535
    %v612 = vpop.f32.mrf.mxu0
    %v613 = vadd.f32 %v425, %v612
    %v614 = vpop.f32.mrf.mxu0
    %v615 = vadd.f32 %v429, %v614
    %v616 = vpop.f32.mrf.mxu0
    %v617 = vpop.f32.mrf.mxu0
    %618 = vdwg.mxu0
    %619 = vmatprep.subr.bf16.mxu0 0
    %620 = vmatpush1.bf16.msra.mxu0 0
    %621 = vmatprep.subr.bf16.mxu0 0
    %622 = vmatpush1.bf16.msra.mxu0 0
    %623 = vmatprep.subr.bf16.mxu0 0
    %624 = vmatpush1.bf16.msra.mxu0 0
    %625 = vmatprep.subr.bf16.mxu0 0
    %626 = vmatpush1.bf16.msra.mxu0 0
    %627 = vmatprep.subr.bf16.mxu0 0
    %628 = vmatpush1.bf16.msra.mxu0 0
    %629 = vmatprep.subr.bf16.mxu0 0
    %630 = vmatpush1.bf16.msra.mxu0 0
    %631 = vmatprep.subr.bf16.mxu0 %v515
    %632 = vmatpush1.bf16.msra.mxu0 %v514
    %633 = vmatprep.subr.bf16.mxu0 %v507
    %634 = vmatpush1.bf16.msra.mxu0 %v506
    %635 = vmatprep.subr.bf16.mxu0 0
    %636 = vmatpush2.bf16.msra.mxu0 0
    %637 = vmatprep.subr.bf16.mxu0 0
    %638 = vmatpush2.bf16.msra.mxu0 0
    %639 = vmatprep.subr.bf16.mxu0 0
    %640 = vmatpush2.bf16.msra.mxu0 0
    %641 = vmatprep.subr.bf16.mxu0 0
    %642 = vmatpush2.bf16.msra.mxu0 0
    %643 = vmatprep.subr.bf16.mxu0 0
    %644 = vmatpush2.bf16.msra.mxu0 0
    %645 = vmatprep.subr.bf16.mxu0 0
    %646 = vmatpush2.bf16.msra.mxu0 0
    %647 = vmatprep.subr.bf16.mxu0 0
    %648 = vmatpush2.bf16.msra.mxu0 0
    %649 = vmatprep.subr.bf16.mxu0 0
    %650 = vmatpush2.bf16.msra.mxu0 0
    %651 = vmatprep.mubr.bf16.mxu0 0
    %652 = vmatmul.mubr.bf16.gmra.mxu0 %v535
    %v653 = vpop.f32.mrf.mxu0
    %v654 = vadd.f32 %v433, %v653
    %v655 = vpop.f32.mrf.mxu0
    %v656 = vadd.f32 %v437, %v655
    %v657 = vpop.f32.mrf.mxu0
    %v658 = vpop.f32.mrf.mxu0
    %659 = vdwg.mxu0
    %660 = vmatprep.subr.bf16.mxu0 0
    %661 = vmatpush1.bf16.msra.mxu0 0
    %662 = vmatprep.subr.bf16.mxu0 0
    %663 = vmatpush1.bf16.msra.mxu0 0
    %664 = vmatprep.subr.bf16.mxu0 0
    %665 = vmatpush1.bf16.msra.mxu0 0
    %666 = vmatprep.subr.bf16.mxu0 0
    %667 = vmatpush1.bf16.msra.mxu0 0
    %668 = vmatprep.subr.bf16.mxu0 0
    %669 = vmatpush1.bf16.msra.mxu0 0
    %670 = vmatprep.subr.bf16.mxu0 0
    %671 = vmatpush1.bf16.msra.mxu0 0
    %672 = vmatprep.subr.bf16.mxu0 %v517
    %673 = vmatpush1.bf16.msra.mxu0 %v516
    %674 = vmatprep.subr.bf16.mxu0 %v509
    %675 = vmatpush1.bf16.msra.mxu0 %v508
    %676 = vmatprep.subr.bf16.mxu0 0
    %677 = vmatpush2.bf16.msra.mxu0 0
    %678 = vmatprep.subr.bf16.mxu0 0
    %679 = vmatpush2.bf16.msra.mxu0 0
    %680 = vmatprep.subr.bf16.mxu0 0
    %681 = vmatpush2.bf16.msra.mxu0 0
    %682 = vmatprep.subr.bf16.mxu0 0
    %683 = vmatpush2.bf16.msra.mxu0 0
    %684 = vmatprep.subr.bf16.mxu0 0
    %685 = vmatpush2.bf16.msra.mxu0 0
    %686 = vmatprep.subr.bf16.mxu0 0
    %687 = vmatpush2.bf16.msra.mxu0 0
    %688 = vmatprep.subr.bf16.mxu0 0
    %689 = vmatpush2.bf16.msra.mxu0 0
    %690 = vmatprep.subr.bf16.mxu0 0
    %691 = vmatpush2.bf16.msra.mxu0 0
    %692 = vmatprep.mubr.bf16.mxu0 0
    %693 = vmatmul.mubr.bf16.gmra.mxu0 %v535
    %v694 = vpop.f32.mrf.mxu0
    %v695 = vadd.f32 %v441, %v694
    %v696 = vpop.f32.mrf.mxu0
    %v697 = vadd.f32 %v445, %v696
    %v698 = vpop.f32.mrf.mxu0
    %v699 = vpop.f32.mrf.mxu0
    %700 = vdwg.mxu0
    %v701 = vmax.f32 %v266, 0.0
    %v702 = vmax.f32 %v268, 0.0
    %v703 = vmax.f32 %v307, 0.0
    %v704 = vmax.f32 %v309, 0.0
    %v705 = vmax.f32 %v348, 0.0
    %v706 = vmax.f32 %v350, 0.0
    %v707 = vmax.f32 %v389, 0.0
    %v708 = vmax.f32 %v391, 0.0
    %v709 = vpack.c.bf16 %v701, %v701
    %v710 = vpack.c.bf16 %v702, %v702
    %v711 = vpack.c.bf16 %v703, %v703
    %v712 = vpack.c.bf16 %v704, %v704
    %v713 = vpack.c.bf16 %v705, %v705
    %v714 = vpack.c.bf16 %v706, %v706
    %v715 = vpack.c.bf16 %v707, %v707
    %v716 = vpack.c.bf16 %v708, %v708
    %v717 = vmax.f32 %v572, 0.0
    %v718 = vmax.f32 %v574, 0.0
    %v719 = vmax.f32 %v613, 0.0
    %v720 = vmax.f32 %v615, 0.0
    %v721 = vmax.f32 %v654, 0.0
    %v722 = vmax.f32 %v656, 0.0
    %v723 = vmax.f32 %v695, 0.0
    %v724 = vmax.f32 %v697, 0.0
    %v725 = vpack.c.bf16 %v717, %v717
    %v726 = vpack.c.bf16 %v718, %v718
    %v727 = vpack.c.bf16 %v719, %v719
    %v728 = vpack.c.bf16 %v720, %v720
    %v729 = vpack.c.bf16 %v721, %v721
    %v730 = vpack.c.bf16 %v722, %v722
    %v731 = vpack.c.bf16 %v723, %v723
    %v732 = vpack.c.bf16 %v724, %v724
    %v733 = vld [vmem:[#allocation6] sm:$0xf]
    %v734 = vld [vmem:[#allocation6 + $0x4] sm:$0xf]
    %v735 = vld [vmem:[#allocation6 + $0x8] sm:$0xf]
    %v736 = vld [vmem:[#allocation6 + $0xc] sm:$0xf]
    %v737 = vld [vmem:[#allocation6 + $0x10] sm:$0xf]
    %v738 = vld [vmem:[#allocation6 + $0x14] sm:$0xf]
    %v739 = vld [vmem:[#allocation6 + $0x18] sm:$0xf]
    %v740 = vld [vmem:[#allocation6 + $0x1c] sm:$0xf]
    %v741 = vld [vmem:[#allocation6 + $0x20] sm:$0xf]
    %v742 = vld [vmem:[#allocation6 + $0x24] sm:$0xf]
    %v743 = vld [vmem:[#allocation6 + $0x28] sm:$0xf]
    %v744 = vld [vmem:[#allocation6 + $0x2c] sm:$0xf]
    %v745 = vld [vmem:[#allocation6 + $0x30] sm:$0xf]
    %v746 = vld [vmem:[#allocation6 + $0x34] sm:$0xf]
    %v747 = vld [vmem:[#allocation6 + $0x38] sm:$0xf]
    %v748 = vld [vmem:[#allocation6 + $0x3c] sm:$0xf]
    %v749 = vld [vmem:[#allocation6 + $0x40] sm:$0xf]
    %v750 = vld [vmem:[#allocation6 + $0x44] sm:$0xf]
    %v751 = vld [vmem:[#allocation6 + $0x48] sm:$0xf]
    %v752 = vld [vmem:[#allocation6 + $0x4c] sm:$0xf]
    %v753 = vld [vmem:[#allocation6 + $0x50] sm:$0xf]
    %v754 = vld [vmem:[#allocation6 + $0x54] sm:$0xf]
    %v755 = vld [vmem:[#allocation6 + $0x58] sm:$0xf]
    %v756 = vld [vmem:[#allocation6 + $0x5c] sm:$0xf]
    %v757 = vld [vmem:[#allocation6 + $0x60] sm:$0xf]
    %v758 = vld [vmem:[#allocation6 + $0x64] sm:$0xf]
    %v759 = vld [vmem:[#allocation6 + $0x68] sm:$0xf]
    %v760 = vld [vmem:[#allocation6 + $0x6c] sm:$0xf]
    %v761 = vld [vmem:[#allocation6 + $0x70] sm:$0xf]
    %v762 = vld [vmem:[#allocation6 + $0x74] sm:$0xf]
    %v763 = vld [vmem:[#allocation6 + $0x78] sm:$0xf]
    %v764 = vld [vmem:[#allocation6 + $0x7c] sm:$0xf]
    %v765 = vld [vmem:[#allocation6 + $0x80] sm:$0xf]
    %v766 = vld [vmem:[#allocation6 + $0x84] sm:$0xf]
    %v767 = vld [vmem:[#allocation6 + $0x88] sm:$0xf]
    %v768 = vld [vmem:[#allocation6 + $0x8c] sm:$0xf]
    %v769 = vld [vmem:[#allocation6 + $0x90] sm:$0xf]
    %v770 = vld [vmem:[#allocation6 + $0x94] sm:$0xf]
    %v771 = vld [vmem:[#allocation6 + $0x98] sm:$0xf]
    %v772 = vld [vmem:[#allocation6 + $0x9c] sm:$0xf]
    %v773 = vld [vmem:[#allocation6 + $0xa0] sm:$0xf]
    %v774 = vld [vmem:[#allocation6 + $0xa4] sm:$0xf]
    %v775 = vld [vmem:[#allocation6 + $0xa8] sm:$0xf]
    %v776 = vld [vmem:[#allocation6 + $0xac] sm:$0xf]
    %v777 = vld [vmem:[#allocation6 + $0xb0] sm:$0xf]
    %v778 = vld [vmem:[#allocation6 + $0xb4] sm:$0xf]
    %v779 = vld [vmem:[#allocation6 + $0xb8] sm:$0xf]
    %v780 = vld [vmem:[#allocation6 + $0xbc] sm:$0xf]
    %v781 = vld [vmem:[#allocation6 + $0xc0] sm:$0xf]
    %v782 = vld [vmem:[#allocation6 + $0xc4] sm:$0xf]
    %v783 = vld [vmem:[#allocation6 + $0xc8] sm:$0xf]
    %v784 = vld [vmem:[#allocation6 + $0xcc] sm:$0xf]
    %v785 = vld [vmem:[#allocation6 + $0xd0] sm:$0xf]
    %v786 = vld [vmem:[#allocation6 + $0xd4] sm:$0xf]
    %v787 = vld [vmem:[#allocation6 + $0xd8] sm:$0xf]
    %v788 = vld [vmem:[#allocation6 + $0xdc] sm:$0xf]
    %v789 = vld [vmem:[#allocation6 + $0xe0] sm:$0xf]
    %v790 = vld [vmem:[#allocation6 + $0xe4] sm:$0xf]
    %v791 = vld [vmem:[#allocation6 + $0xe8] sm:$0xf]
    %v792 = vld [vmem:[#allocation6 + $0xec] sm:$0xf]
    %v793 = vld [vmem:[#allocation6 + $0xf0] sm:$0xf]
    %v794 = vld [vmem:[#allocation6 + $0xf4] sm:$0xf]
    %v795 = vld [vmem:[#allocation6 + $0xf8] sm:$0xf]
    %v796 = vld [vmem:[#allocation6 + $0xfc] sm:$0xf]
    %v797 = vld [vmem:[#allocation6 + $0x100] sm:$0xf]
    %v798 = vld [vmem:[#allocation6 + $0x104] sm:$0xf]
    %v799 = vld [vmem:[#allocation6 + $0x108] sm:$0xf]
    %v800 = vld [vmem:[#allocation6 + $0x10c] sm:$0xf]
    %v801 = vld [vmem:[#allocation6 + $0x110] sm:$0xf]
    %v802 = vld [vmem:[#allocation6 + $0x114] sm:$0xf]
    %v803 = vld [vmem:[#allocation6 + $0x118] sm:$0xf]
    %v804 = vld [vmem:[#allocation6 + $0x11c] sm:$0xf]
    %v805 = vld [vmem:[#allocation6 + $0x120] sm:$0xf]
    %v806 = vld [vmem:[#allocation6 + $0x124] sm:$0xf]
    %v807 = vld [vmem:[#allocation6 + $0x128] sm:$0xf]
    %v808 = vld [vmem:[#allocation6 + $0x12c] sm:$0xf]
    %v809 = vld [vmem:[#allocation6 + $0x130] sm:$0xf]
    %v810 = vld [vmem:[#allocation6 + $0x134] sm:$0xf]
    %v811 = vld [vmem:[#allocation6 + $0x138] sm:$0xf]
    %v812 = vld [vmem:[#allocation6 + $0x13c] sm:$0xf]
    %v813 = vld [vmem:[#allocation6 + $0x140] sm:$0xf]
    %v814 = vld [vmem:[#allocation6 + $0x144] sm:$0xf]
    %v815 = vld [vmem:[#allocation6 + $0x148] sm:$0xf]
    %v816 = vld [vmem:[#allocation6 + $0x14c] sm:$0xf]
    %v817 = vld [vmem:[#allocation6 + $0x150] sm:$0xf]
    %v818 = vld [vmem:[#allocation6 + $0x154] sm:$0xf]
    %v819 = vld [vmem:[#allocation6 + $0x158] sm:$0xf]
    %v820 = vld [vmem:[#allocation6 + $0x15c] sm:$0xf]
    %v821 = vld [vmem:[#allocation6 + $0x160] sm:$0xf]
    %v822 = vld [vmem:[#allocation6 + $0x164] sm:$0xf]
    %v823 = vld [vmem:[#allocation6 + $0x168] sm:$0xf]
    %v824 = vld [vmem:[#allocation6 + $0x16c] sm:$0xf]
    %v825 = vld [vmem:[#allocation6 + $0x170] sm:$0xf]
    %v826 = vld [vmem:[#allocation6 + $0x174] sm:$0xf]
    %v827 = vld [vmem:[#allocation6 + $0x178] sm:$0xf]
    %v828 = vld [vmem:[#allocation6 + $0x17c] sm:$0xf]
    %v829 = vld [vmem:[#allocation6 + $0x180] sm:$0xf]
    %v830 = vld [vmem:[#allocation6 + $0x184] sm:$0xf]
    %v831 = vld [vmem:[#allocation6 + $0x188] sm:$0xf]
    %v832 = vld [vmem:[#allocation6 + $0x18c] sm:$0xf]
    %v833 = vld [vmem:[#allocation6 + $0x190] sm:$0xf]
    %v834 = vld [vmem:[#allocation6 + $0x194] sm:$0xf]
    %v835 = vld [vmem:[#allocation6 + $0x198] sm:$0xf]
    %v836 = vld [vmem:[#allocation6 + $0x19c] sm:$0xf]
    %v837 = vld [vmem:[#allocation6 + $0x1a0] sm:$0xf]
    %v838 = vld [vmem:[#allocation6 + $0x1a4] sm:$0xf]
    %v839 = vld [vmem:[#allocation6 + $0x1a8] sm:$0xf]
    %v840 = vld [vmem:[#allocation6 + $0x1ac] sm:$0xf]
    %v841 = vld [vmem:[#allocation6 + $0x1b0] sm:$0xf]
    %v842 = vld [vmem:[#allocation6 + $0x1b4] sm:$0xf]
    %v843 = vld [vmem:[#allocation6 + $0x1b8] sm:$0xf]
    %v844 = vld [vmem:[#allocation6 + $0x1bc] sm:$0xf]
    %v845 = vld [vmem:[#allocation6 + $0x1c0] sm:$0xf]
    %v846 = vld [vmem:[#allocation6 + $0x1c4] sm:$0xf]
    %v847 = vld [vmem:[#allocation6 + $0x1c8] sm:$0xf]
    %v848 = vld [vmem:[#allocation6 + $0x1cc] sm:$0xf]
    %v849 = vld [vmem:[#allocation6 + $0x1d0] sm:$0xf]
    %v850 = vld [vmem:[#allocation6 + $0x1d4] sm:$0xf]
    %v851 = vld [vmem:[#allocation6 + $0x1d8] sm:$0xf]
    %v852 = vld [vmem:[#allocation6 + $0x1dc] sm:$0xf]
    %v853 = vld [vmem:[#allocation6 + $0x1e0] sm:$0xf]
    %v854 = vld [vmem:[#allocation6 + $0x1e4] sm:$0xf]
    %v855 = vld [vmem:[#allocation6 + $0x1e8] sm:$0xf]
    %v856 = vld [vmem:[#allocation6 + $0x1ec] sm:$0xf]
    %v857 = vld [vmem:[#allocation6 + $0x1f0] sm:$0xf]
    %v858 = vld [vmem:[#allocation6 + $0x1f4] sm:$0xf]
    %v859 = vld [vmem:[#allocation6 + $0x1f8] sm:$0xf]
    %v860 = vld [vmem:[#allocation6 + $0x1fc] sm:$0xf]
    %v861 = vld [vmem:[#allocation7] sm:$0xf]
    %v862 = vld [vmem:[#allocation7 + $0x4] sm:$0xf]
    %v863 = vld [vmem:[#allocation7 + $0x8] sm:$0xf]
    %v864 = vld [vmem:[#allocation7 + $0xc] sm:$0xf]
    %v865 = vld [vmem:[#allocation7 + $0x10] sm:$0xf]
    %v866 = vld [vmem:[#allocation7 + $0x14] sm:$0xf]
    %v867 = vld [vmem:[#allocation7 + $0x18] sm:$0xf]
    %v868 = vld [vmem:[#allocation7 + $0x1c] sm:$0xf]
    %v869 = vld [vmem:[#allocation7 + $0x20] sm:$0xf]
    %v870 = vld [vmem:[#allocation7 + $0x24] sm:$0xf]
    %v871 = vld [vmem:[#allocation7 + $0x28] sm:$0xf]
    %v872 = vld [vmem:[#allocation7 + $0x2c] sm:$0xf]
    %v873 = vld [vmem:[#allocation7 + $0x30] sm:$0xf]
    %v874 = vld [vmem:[#allocation7 + $0x34] sm:$0xf]
    %v875 = vld [vmem:[#allocation7 + $0x38] sm:$0xf]
    %v876 = vld [vmem:[#allocation7 + $0x3c] sm:$0xf]
    %v877 = vld [vmem:[#allocation7 + $0x40] sm:$0xf]
    %v878 = vld [vmem:[#allocation7 + $0x44] sm:$0xf]
    %v879 = vld [vmem:[#allocation7 + $0x48] sm:$0xf]
    %v880 = vld [vmem:[#allocation7 + $0x4c] sm:$0xf]
    %v881 = vld [vmem:[#allocation7 + $0x50] sm:$0xf]
    %v882 = vld [vmem:[#allocation7 + $0x54] sm:$0xf]
    %v883 = vld [vmem:[#allocation7 + $0x58] sm:$0xf]
    %v884 = vld [vmem:[#allocation7 + $0x5c] sm:$0xf]
    %v885 = vld [vmem:[#allocation7 + $0x60] sm:$0xf]
    %v886 = vld [vmem:[#allocation7 + $0x64] sm:$0xf]
    %v887 = vld [vmem:[#allocation7 + $0x68] sm:$0xf]
    %v888 = vld [vmem:[#allocation7 + $0x6c] sm:$0xf]
    %v889 = vld [vmem:[#allocation7 + $0x70] sm:$0xf]
    %v890 = vld [vmem:[#allocation7 + $0x74] sm:$0xf]
    %v891 = vld [vmem:[#allocation7 + $0x78] sm:$0xf]
    %v892 = vld [vmem:[#allocation7 + $0x7c] sm:$0xf]
    %v893 = vld [vmem:[#allocation7 + $0x80] sm:$0xf]
    %v894 = vld [vmem:[#allocation7 + $0x84] sm:$0xf]
    %v895 = vld [vmem:[#allocation7 + $0x88] sm:$0xf]
    %v896 = vld [vmem:[#allocation7 + $0x8c] sm:$0xf]
    %v897 = vld [vmem:[#allocation7 + $0x90] sm:$0xf]
    %v898 = vld [vmem:[#allocation7 + $0x94] sm:$0xf]
    %v899 = vld [vmem:[#allocation7 + $0x98] sm:$0xf]
    %v900 = vld [vmem:[#allocation7 + $0x9c] sm:$0xf]
    %v901 = vld [vmem:[#allocation7 + $0xa0] sm:$0xf]
    %v902 = vld [vmem:[#allocation7 + $0xa4] sm:$0xf]
    %v903 = vld [vmem:[#allocation7 + $0xa8] sm:$0xf]
    %v904 = vld [vmem:[#allocation7 + $0xac] sm:$0xf]
    %v905 = vld [vmem:[#allocation7 + $0xb0] sm:$0xf]
    %v906 = vld [vmem:[#allocation7 + $0xb4] sm:$0xf]
    %v907 = vld [vmem:[#allocation7 + $0xb8] sm:$0xf]
    %v908 = vld [vmem:[#allocation7 + $0xbc] sm:$0xf]
    %v909 = vld [vmem:[#allocation7 + $0xc0] sm:$0xf]
    %v910 = vld [vmem:[#allocation7 + $0xc4] sm:$0xf]
    %v911 = vld [vmem:[#allocation7 + $0xc8] sm:$0xf]
    %v912 = vld [vmem:[#allocation7 + $0xcc] sm:$0xf]
    %v913 = vld [vmem:[#allocation7 + $0xd0] sm:$0xf]
    %v914 = vld [vmem:[#allocation7 + $0xd4] sm:$0xf]
    %v915 = vld [vmem:[#allocation7 + $0xd8] sm:$0xf]
    %v916 = vld [vmem:[#allocation7 + $0xdc] sm:$0xf]
    %v917 = vld [vmem:[#allocation7 + $0xe0] sm:$0xf]
    %v918 = vld [vmem:[#allocation7 + $0xe4] sm:$0xf]
    %v919 = vld [vmem:[#allocation7 + $0xe8] sm:$0xf]
    %v920 = vld [vmem:[#allocation7 + $0xec] sm:$0xf]
    %v921 = vld [vmem:[#allocation7 + $0xf0] sm:$0xf]
    %v922 = vld [vmem:[#allocation7 + $0xf4] sm:$0xf]
    %v923 = vld [vmem:[#allocation7 + $0xf8] sm:$0xf]
    %v924 = vld [vmem:[#allocation7 + $0xfc] sm:$0xf]
    %v925 = vld [vmem:[#allocation7 + $0x100] sm:$0xf]
    %v926 = vld [vmem:[#allocation7 + $0x104] sm:$0xf]
    %v927 = vld [vmem:[#allocation7 + $0x108] sm:$0xf]
    %v928 = vld [vmem:[#allocation7 + $0x10c] sm:$0xf]
    %v929 = vld [vmem:[#allocation7 + $0x110] sm:$0xf]
    %v930 = vld [vmem:[#allocation7 + $0x114] sm:$0xf]
    %v931 = vld [vmem:[#allocation7 + $0x118] sm:$0xf]
    %v932 = vld [vmem:[#allocation7 + $0x11c] sm:$0xf]
    %v933 = vld [vmem:[#allocation7 + $0x120] sm:$0xf]
    %v934 = vld [vmem:[#allocation7 + $0x124] sm:$0xf]
    %v935 = vld [vmem:[#allocation7 + $0x128] sm:$0xf]
    %v936 = vld [vmem:[#allocation7 + $0x12c] sm:$0xf]
    %v937 = vld [vmem:[#allocation7 + $0x130] sm:$0xf]
    %v938 = vld [vmem:[#allocation7 + $0x134] sm:$0xf]
    %v939 = vld [vmem:[#allocation7 + $0x138] sm:$0xf]
    %v940 = vld [vmem:[#allocation7 + $0x13c] sm:$0xf]
    %v941 = vld [vmem:[#allocation7 + $0x140] sm:$0xf]
    %v942 = vld [vmem:[#allocation7 + $0x144] sm:$0xf]
    %v943 = vld [vmem:[#allocation7 + $0x148] sm:$0xf]
    %v944 = vld [vmem:[#allocation7 + $0x14c] sm:$0xf]
    %v945 = vld [vmem:[#allocation7 + $0x150] sm:$0xf]
    %v946 = vld [vmem:[#allocation7 + $0x154] sm:$0xf]
    %v947 = vld [vmem:[#allocation7 + $0x158] sm:$0xf]
    %v948 = vld [vmem:[#allocation7 + $0x15c] sm:$0xf]
    %v949 = vld [vmem:[#allocation7 + $0x160] sm:$0xf]
    %v950 = vld [vmem:[#allocation7 + $0x164] sm:$0xf]
    %v951 = vld [vmem:[#allocation7 + $0x168] sm:$0xf]
    %v952 = vld [vmem:[#allocation7 + $0x16c] sm:$0xf]
    %v953 = vld [vmem:[#allocation7 + $0x170] sm:$0xf]
    %v954 = vld [vmem:[#allocation7 + $0x174] sm:$0xf]
    %v955 = vld [vmem:[#allocation7 + $0x178] sm:$0xf]
    %v956 = vld [vmem:[#allocation7 + $0x17c] sm:$0xf]
    %v957 = vld [vmem:[#allocation7 + $0x180] sm:$0xf]
    %v958 = vld [vmem:[#allocation7 + $0x184] sm:$0xf]
    %v959 = vld [vmem:[#allocation7 + $0x188] sm:$0xf]
    %v960 = vld [vmem:[#allocation7 + $0x18c] sm:$0xf]
    %v961 = vld [vmem:[#allocation7 + $0x190] sm:$0xf]
    %v962 = vld [vmem:[#allocation7 + $0x194] sm:$0xf]
    %v963 = vld [vmem:[#allocation7 + $0x198] sm:$0xf]
    %v964 = vld [vmem:[#allocation7 + $0x19c] sm:$0xf]
    %v965 = vld [vmem:[#allocation7 + $0x1a0] sm:$0xf]
    %v966 = vld [vmem:[#allocation7 + $0x1a4] sm:$0xf]
    %v967 = vld [vmem:[#allocation7 + $0x1a8] sm:$0xf]
    %v968 = vld [vmem:[#allocation7 + $0x1ac] sm:$0xf]
    %v969 = vld [vmem:[#allocation7 + $0x1b0] sm:$0xf]
    %v970 = vld [vmem:[#allocation7 + $0x1b4] sm:$0xf]
    %v971 = vld [vmem:[#allocation7 + $0x1b8] sm:$0xf]
    %v972 = vld [vmem:[#allocation7 + $0x1bc] sm:$0xf]
    %v973 = vld [vmem:[#allocation7 + $0x1c0] sm:$0xf]
    %v974 = vld [vmem:[#allocation7 + $0x1c4] sm:$0xf]
    %v975 = vld [vmem:[#allocation7 + $0x1c8] sm:$0xf]
    %v976 = vld [vmem:[#allocation7 + $0x1cc] sm:$0xf]
    %v977 = vld [vmem:[#allocation7 + $0x1d0] sm:$0xf]
    %v978 = vld [vmem:[#allocation7 + $0x1d4] sm:$0xf]
    %v979 = vld [vmem:[#allocation7 + $0x1d8] sm:$0xf]
    %v980 = vld [vmem:[#allocation7 + $0x1dc] sm:$0xf]
    %v981 = vld [vmem:[#allocation7 + $0x1e0] sm:$0xf]
    %v982 = vld [vmem:[#allocation7 + $0x1e4] sm:$0xf]
    %v983 = vld [vmem:[#allocation7 + $0x1e8] sm:$0xf]
    %v984 = vld [vmem:[#allocation7 + $0x1ec] sm:$0xf]
    %v985 = vld [vmem:[#allocation7 + $0x1f0] sm:$0xf]
    %v986 = vld [vmem:[#allocation7 + $0x1f4] sm:$0xf]
    %v987 = vld [vmem:[#allocation7 + $0x1f8] sm:$0xf]
    %v988 = vld [vmem:[#allocation7 + $0x1fc] sm:$0xf]
    %v1117 = vunpack.c.l.b16 %v861
    %v1118 = vunpack.c.l.b16 %v862
    %v1119 = vunpack.c.l.b16 %v863
    %v1120 = vunpack.c.l.b16 %v864
    %v1121 = vunpack.c.l.b16 %v865
    %v1122 = vunpack.c.l.b16 %v866
    %v1123 = vunpack.c.l.b16 %v867
    %v1124 = vunpack.c.l.b16 %v868
    %v1125 = vunpack.c.l.b16 %v869
    %v1126 = vunpack.c.l.b16 %v870
    %v1127 = vunpack.c.l.b16 %v871
    %v1128 = vunpack.c.l.b16 %v872
    %v1129 = vunpack.c.l.b16 %v873
    %v1130 = vunpack.c.l.b16 %v874
    %v1131 = vunpack.c.l.b16 %v875
    %v1132 = vunpack.c.l.b16 %v876
    %v1133 = vunpack.c.l.b16 %v877
    %v1134 = vunpack.c.l.b16 %v878
    %v1135 = vunpack.c.l.b16 %v879
    %v1136 = vunpack.c.l.b16 %v880
    %v1137 = vunpack.c.l.b16 %v881
    %v1138 = vunpack.c.l.b16 %v882
    %v1139 = vunpack.c.l.b16 %v883
    %v1140 = vunpack.c.l.b16 %v884
    %v1141 = vunpack.c.l.b16 %v885
    %v1142 = vunpack.c.l.b16 %v886
    %v1143 = vunpack.c.l.b16 %v887
    %v1144 = vunpack.c.l.b16 %v888
    %v1145 = vunpack.c.l.b16 %v889
    %v1146 = vunpack.c.l.b16 %v890
    %v1147 = vunpack.c.l.b16 %v891
    %v1148 = vunpack.c.l.b16 %v892
    %v1149 = vunpack.c.l.b16 %v893
    %v1150 = vunpack.c.l.b16 %v894
    %v1151 = vunpack.c.l.b16 %v895
    %v1152 = vunpack.c.l.b16 %v896
    %v1153 = vunpack.c.l.b16 %v897
    %v1154 = vunpack.c.l.b16 %v898
    %v1155 = vunpack.c.l.b16 %v899
    %v1156 = vunpack.c.l.b16 %v900
    %v1157 = vunpack.c.l.b16 %v901
    %v1158 = vunpack.c.l.b16 %v902
    %v1159 = vunpack.c.l.b16 %v903
    %v1160 = vunpack.c.l.b16 %v904
    %v1161 = vunpack.c.l.b16 %v905
    %v1162 = vunpack.c.l.b16 %v906
    %v1163 = vunpack.c.l.b16 %v907
    %v1164 = vunpack.c.l.b16 %v908
    %v1165 = vunpack.c.l.b16 %v909
    %v1166 = vunpack.c.l.b16 %v910
    %v1167 = vunpack.c.l.b16 %v911
    %v1168 = vunpack.c.l.b16 %v912
    %v1169 = vunpack.c.l.b16 %v913
    %v1170 = vunpack.c.l.b16 %v914
    %v1171 = vunpack.c.l.b16 %v915
    %v1172 = vunpack.c.l.b16 %v916
    %v1173 = vunpack.c.l.b16 %v917
    %v1174 = vunpack.c.l.b16 %v918
    %v1175 = vunpack.c.l.b16 %v919
    %v1176 = vunpack.c.l.b16 %v920
    %v1177 = vunpack.c.l.b16 %v921
    %v1178 = vunpack.c.l.b16 %v922
    %v1179 = vunpack.c.l.b16 %v923
    %v1180 = vunpack.c.l.b16 %v924
    %v1181 = vunpack.c.l.b16 %v925
    %v1182 = vunpack.c.l.b16 %v926
    %v1183 = vunpack.c.l.b16 %v927
    %v1184 = vunpack.c.l.b16 %v928
    %v1185 = vunpack.c.l.b16 %v929
    %v1186 = vunpack.c.l.b16 %v930
    %v1187 = vunpack.c.l.b16 %v931
    %v1188 = vunpack.c.l.b16 %v932
    %v1189 = vunpack.c.l.b16 %v933
    %v1190 = vunpack.c.l.b16 %v934
    %v1191 = vunpack.c.l.b16 %v935
    %v1192 = vunpack.c.l.b16 %v936
    %v1193 = vunpack.c.l.b16 %v937
    %v1194 = vunpack.c.l.b16 %v938
    %v1195 = vunpack.c.l.b16 %v939
    %v1196 = vunpack.c.l.b16 %v940
    %v1197 = vunpack.c.l.b16 %v941
    %v1198 = vunpack.c.l.b16 %v942
    %v1199 = vunpack.c.l.b16 %v943
    %v1200 = vunpack.c.l.b16 %v944
    %v1201 = vunpack.c.l.b16 %v945
    %v1202 = vunpack.c.l.b16 %v946
    %v1203 = vunpack.c.l.b16 %v947
    %v1204 = vunpack.c.l.b16 %v948
    %v1205 = vunpack.c.l.b16 %v949
    %v1206 = vunpack.c.l.b16 %v950
    %v1207 = vunpack.c.l.b16 %v951
    %v1208 = vunpack.c.l.b16 %v952
    %v1209 = vunpack.c.l.b16 %v953
    %v1210 = vunpack.c.l.b16 %v954
    %v1211 = vunpack.c.l.b16 %v955
    %v1212 = vunpack.c.l.b16 %v956
    %v1213 = vunpack.c.l.b16 %v957
    %v1214 = vunpack.c.l.b16 %v958
    %v1215 = vunpack.c.l.b16 %v959
    %v1216 = vunpack.c.l.b16 %v960
    %v1217 = vunpack.c.l.b16 %v961
    %v1218 = vunpack.c.l.b16 %v962
    %v1219 = vunpack.c.l.b16 %v963
    %v1220 = vunpack.c.l.b16 %v964
    %v1221 = vunpack.c.l.b16 %v965
    %v1222 = vunpack.c.l.b16 %v966
    %v1223 = vunpack.c.l.b16 %v967
    %v1224 = vunpack.c.l.b16 %v968
    %v1225 = vunpack.c.l.b16 %v969
    %v1226 = vunpack.c.l.b16 %v970
    %v1227 = vunpack.c.l.b16 %v971
    %v1228 = vunpack.c.l.b16 %v972
    %v1229 = vunpack.c.l.b16 %v973
    %v1230 = vunpack.c.l.b16 %v974
    %v1231 = vunpack.c.l.b16 %v975
    %v1232 = vunpack.c.l.b16 %v976
    %v1233 = vunpack.c.l.b16 %v977
    %v1234 = vunpack.c.l.b16 %v978
    %v1235 = vunpack.c.l.b16 %v979
    %v1236 = vunpack.c.l.b16 %v980
    %v1237 = vunpack.c.l.b16 %v981
    %v1238 = vunpack.c.l.b16 %v982
    %v1239 = vunpack.c.l.b16 %v983
    %v1240 = vunpack.c.l.b16 %v984
    %v1241 = vunpack.c.l.b16 %v985
    %v1242 = vunpack.c.l.b16 %v986
    %v1243 = vunpack.c.l.b16 %v987
    %v1244 = vunpack.c.l.b16 %v988
    %v1245 = vpack.c.b16 %v1118, %v1117
    %v1246 = vpack.c.b16 %v1120, %v1119
    %v1247 = vpack.c.b16 %v1122, %v1121
    %v1248 = vpack.c.b16 %v1124, %v1123
    %v1249 = vpack.c.b16 %v1126, %v1125
    %v1250 = vpack.c.b16 %v1128, %v1127
    %v1251 = vpack.c.b16 %v1130, %v1129
    %v1252 = vpack.c.b16 %v1132, %v1131
    %v1253 = vpack.c.b16 %v1134, %v1133
    %v1254 = vpack.c.b16 %v1136, %v1135
    %v1255 = vpack.c.b16 %v1138, %v1137
    %v1256 = vpack.c.b16 %v1140, %v1139
    %v1257 = vpack.c.b16 %v1142, %v1141
    %v1258 = vpack.c.b16 %v1144, %v1143
    %v1259 = vpack.c.b16 %v1146, %v1145
    %v1260 = vpack.c.b16 %v1148, %v1147
    %v1261 = vpack.c.b16 %v1150, %v1149
    %v1262 = vpack.c.b16 %v1152, %v1151
    %v1263 = vpack.c.b16 %v1154, %v1153
    %v1264 = vpack.c.b16 %v1156, %v1155
    %v1265 = vpack.c.b16 %v1158, %v1157
    %v1266 = vpack.c.b16 %v1160, %v1159
    %v1267 = vpack.c.b16 %v1162, %v1161
    %v1268 = vpack.c.b16 %v1164, %v1163
    %v1269 = vpack.c.b16 %v1166, %v1165
    %v1270 = vpack.c.b16 %v1168, %v1167
    %v1271 = vpack.c.b16 %v1170, %v1169
    %v1272 = vpack.c.b16 %v1172, %v1171
    %v1273 = vpack.c.b16 %v1174, %v1173
    %v1274 = vpack.c.b16 %v1176, %v1175
    %v1275 = vpack.c.b16 %v1178, %v1177
    %v1276 = vpack.c.b16 %v1180, %v1179
    %v1277 = vpack.c.b16 %v1182, %v1181
    %v1278 = vpack.c.b16 %v1184, %v1183
    %v1279 = vpack.c.b16 %v1186, %v1185
    %v1280 = vpack.c.b16 %v1188, %v1187
    %v1281 = vpack.c.b16 %v1190, %v1189
    %v1282 = vpack.c.b16 %v1192, %v1191
    %v1283 = vpack.c.b16 %v1194, %v1193
    %v1284 = vpack.c.b16 %v1196, %v1195
    %v1285 = vpack.c.b16 %v1198, %v1197
    %v1286 = vpack.c.b16 %v1200, %v1199
    %v1287 = vpack.c.b16 %v1202, %v1201
    %v1288 = vpack.c.b16 %v1204, %v1203
    %v1289 = vpack.c.b16 %v1206, %v1205
    %v1290 = vpack.c.b16 %v1208, %v1207
    %v1291 = vpack.c.b16 %v1210, %v1209
    %v1292 = vpack.c.b16 %v1212, %v1211
    %v1293 = vpack.c.b16 %v1214, %v1213
    %v1294 = vpack.c.b16 %v1216, %v1215
    %v1295 = vpack.c.b16 %v1218, %v1217
    %v1296 = vpack.c.b16 %v1220, %v1219
    %v1297 = vpack.c.b16 %v1222, %v1221
    %v1298 = vpack.c.b16 %v1224, %v1223
    %v1299 = vpack.c.b16 %v1226, %v1225
    %v1300 = vpack.c.b16 %v1228, %v1227
    %v1301 = vpack.c.b16 %v1230, %v1229
    %v1302 = vpack.c.b16 %v1232, %v1231
    %v1303 = vpack.c.b16 %v1234, %v1233
    %v1304 = vpack.c.b16 %v1236, %v1235
    %v1305 = vpack.c.b16 %v1238, %v1237
    %v1306 = vpack.c.b16 %v1240, %v1239
    %v1307 = vpack.c.b16 %v1242, %v1241
    %v1308 = vpack.c.b16 %v1244, %v1243
    %1373 = vmatprep.subr.bf16.mxu0 0
    %1374 = vmatpush1.bf16.msra.mxu0 %v1252
    %1375 = vmatprep.subr.bf16.mxu0 0
    %1376 = vmatpush1.bf16.msra.mxu0 %v1251
    %1377 = vmatprep.subr.bf16.mxu0 0
    %1378 = vmatpush1.bf16.msra.mxu0 %v1250
    %1379 = vmatprep.subr.bf16.mxu0 0
    %1380 = vmatpush1.bf16.msra.mxu0 %v1249
    %1381 = vmatprep.subr.bf16.mxu0 0
    %1382 = vmatpush1.bf16.msra.mxu0 %v1248
    %1383 = vmatprep.subr.bf16.mxu0 0
    %1384 = vmatpush1.bf16.msra.mxu0 %v1247
    %1385 = vmatprep.subr.bf16.mxu0 0
    %1386 = vmatpush1.bf16.msra.mxu0 %v1246
    %1387 = vmatprep.subr.bf16.mxu0 0
    %1388 = vmatpush1.bf16.msra.mxu0 %v1245
    %1389 = vmatprep.subr.bf16.mxu0 0
    %1390 = vmatpush2.bf16.msra.mxu0 %v1260
    %1391 = vmatprep.subr.bf16.mxu0 0
    %1392 = vmatpush2.bf16.msra.mxu0 %v1259
    %1393 = vmatprep.subr.bf16.mxu0 0
    %1394 = vmatpush2.bf16.msra.mxu0 %v1258
    %1395 = vmatprep.subr.bf16.mxu0 0
    %1396 = vmatpush2.bf16.msra.mxu0 %v1257
    %1397 = vmatprep.subr.bf16.mxu0 0
    %1398 = vmatpush2.bf16.msra.mxu0 %v1256
    %1399 = vmatprep.subr.bf16.mxu0 0
    %1400 = vmatpush2.bf16.msra.mxu0 %v1255
    %1401 = vmatprep.subr.bf16.mxu0 0
    %1402 = vmatpush2.bf16.msra.mxu0 %v1254
    %1403 = vmatprep.subr.bf16.mxu0 0
    %1404 = vmatpush2.bf16.msra.mxu0 %v1253
    %1405 = vmatprep.mubr.bf16.mxu0 %v726
    %1406 = vmatmul.mubr.bf16.gmra.mxu0 %v725
    %v1407 = vpop.f32.mrf.mxu0
    %v1408 = vadd.f32 0.0, %v1407
    %v1409 = vpop.f32.mrf.mxu0
    %v1410 = vpop.f32.mrf.mxu0
    %v1411 = vpop.f32.mrf.mxu0
    %1412 = vdwg.mxu0
    %1413 = vmatprep.subr.bf16.mxu0 0
    %1414 = vmatpush1.bf16.msra.mxu0 %v1268
    %1415 = vmatprep.subr.bf16.mxu0 0
    %1416 = vmatpush1.bf16.msra.mxu0 %v1267
    %1417 = vmatprep.subr.bf16.mxu0 0
    %1418 = vmatpush1.bf16.msra.mxu0 %v1266
    %1419 = vmatprep.subr.bf16.mxu0 0
    %1420 = vmatpush1.bf16.msra.mxu0 %v1265
    %1421 = vmatprep.subr.bf16.mxu0 0
    %1422 = vmatpush1.bf16.msra.mxu0 %v1264
    %1423 = vmatprep.subr.bf16.mxu0 0
    %1424 = vmatpush1.bf16.msra.mxu0 %v1263
    %1425 = vmatprep.subr.bf16.mxu0 0
    %1426 = vmatpush1.bf16.msra.mxu0 %v1262
    %1427 = vmatprep.subr.bf16.mxu0 0
    %1428 = vmatpush1.bf16.msra.mxu0 %v1261
    %1429 = vmatprep.subr.bf16.mxu0 0
    %1430 = vmatpush2.bf16.msra.mxu0 %v1276
    %1431 = vmatprep.subr.bf16.mxu0 0
    %1432 = vmatpush2.bf16.msra.mxu0 %v1275
    %1433 = vmatprep.subr.bf16.mxu0 0
    %1434 = vmatpush2.bf16.msra.mxu0 %v1274
    %1435 = vmatprep.subr.bf16.mxu0 0
    %1436 = vmatpush2.bf16.msra.mxu0 %v1273
    %1437 = vmatprep.subr.bf16.mxu0 0
    %1438 = vmatpush2.bf16.msra.mxu0 %v1272
    %1439 = vmatprep.subr.bf16.mxu0 0
    %1440 = vmatpush2.bf16.msra.mxu0 %v1271
    %1441 = vmatprep.subr.bf16.mxu0 0
    %1442 = vmatpush2.bf16.msra.mxu0 %v1270
    %1443 = vmatprep.subr.bf16.mxu0 0
    %1444 = vmatpush2.bf16.msra.mxu0 %v1269
    %1445 = vmatprep.mubr.bf16.mxu0 %v728
    %1446 = vmatmul.mubr.bf16.gmra.mxu0 %v727
    %v1447 = vpop.f32.mrf.mxu0
    %v1448 = vadd.f32 %v1408, %v1447
    %v1449 = vpop.f32.mrf.mxu0
    %v1450 = vpop.f32.mrf.mxu0
    %v1451 = vpop.f32.mrf.mxu0
    %1452 = vdwg.mxu0
    %1453 = vmatprep.subr.bf16.mxu0 0
    %1454 = vmatpush1.bf16.msra.mxu0 %v1284
    %1455 = vmatprep.subr.bf16.mxu0 0
    %1456 = vmatpush1.bf16.msra.mxu0 %v1283
    %1457 = vmatprep.subr.bf16.mxu0 0
    %1458 = vmatpush1.bf16.msra.mxu0 %v1282
    %1459 = vmatprep.subr.bf16.mxu0 0
    %1460 = vmatpush1.bf16.msra.mxu0 %v1281
    %1461 = vmatprep.subr.bf16.mxu0 0
    %1462 = vmatpush1.bf16.msra.mxu0 %v1280
    %1463 = vmatprep.subr.bf16.mxu0 0
    %1464 = vmatpush1.bf16.msra.mxu0 %v1279
    %1465 = vmatprep.subr.bf16.mxu0 0
    %1466 = vmatpush1.bf16.msra.mxu0 %v1278
    %1467 = vmatprep.subr.bf16.mxu0 0
    %1468 = vmatpush1.bf16.msra.mxu0 %v1277
    %1469 = vmatprep.subr.bf16.mxu0 0
    %1470 = vmatpush2.bf16.msra.mxu0 %v1292
    %1471 = vmatprep.subr.bf16.mxu0 0
    %1472 = vmatpush2.bf16.msra.mxu0 %v1291
    %1473 = vmatprep.subr.bf16.mxu0 0
    %1474 = vmatpush2.bf16.msra.mxu0 %v1290
    %1475 = vmatprep.subr.bf16.mxu0 0
    %1476 = vmatpush2.bf16.msra.mxu0 %v1289
    %1477 = vmatprep.subr.bf16.mxu0 0
    %1478 = vmatpush2.bf16.msra.mxu0 %v1288
    %1479 = vmatprep.subr.bf16.mxu0 0
    %1480 = vmatpush2.bf16.msra.mxu0 %v1287
    %1481 = vmatprep.subr.bf16.mxu0 0
    %1482 = vmatpush2.bf16.msra.mxu0 %v1286
    %1483 = vmatprep.subr.bf16.mxu0 0
    %1484 = vmatpush2.bf16.msra.mxu0 %v1285
    %1485 = vmatprep.mubr.bf16.mxu0 %v730
    %1486 = vmatmul.mubr.bf16.gmra.mxu0 %v729
    %v1487 = vpop.f32.mrf.mxu0
    %v1488 = vadd.f32 %v1448, %v1487
    %v1489 = vpop.f32.mrf.mxu0
    %v1490 = vpop.f32.mrf.mxu0
    %v1491 = vpop.f32.mrf.mxu0
    %1492 = vdwg.mxu0
    %1493 = vmatprep.subr.bf16.mxu0 0
    %1494 = vmatpush1.bf16.msra.mxu0 %v1300
    %1495 = vmatprep.subr.bf16.mxu0 0
    %1496 = vmatpush1.bf16.msra.mxu0 %v1299
    %1497 = vmatprep.subr.bf16.mxu0 0
    %1498 = vmatpush1.bf16.msra.mxu0 %v1298
    %1499 = vmatprep.subr.bf16.mxu0 0
    %1500 = vmatpush1.bf16.msra.mxu0 %v1297
    %1501 = vmatprep.subr.bf16.mxu0 0
    %1502 = vmatpush1.bf16.msra.mxu0 %v1296
    %1503 = vmatprep.subr.bf16.mxu0 0
    %1504 = vmatpush1.bf16.msra.mxu0 %v1295
    %1505 = vmatprep.subr.bf16.mxu0 0
    %1506 = vmatpush1.bf16.msra.mxu0 %v1294
    %1507 = vmatprep.subr.bf16.mxu0 0
    %1508 = vmatpush1.bf16.msra.mxu0 %v1293
    %1509 = vmatprep.subr.bf16.mxu0 0
    %1510 = vmatpush2.bf16.msra.mxu0 %v1308
    %1511 = vmatprep.subr.bf16.mxu0 0
    %1512 = vmatpush2.bf16.msra.mxu0 %v1307
    %1513 = vmatprep.subr.bf16.mxu0 0
    %1514 = vmatpush2.bf16.msra.mxu0 %v1306
    %1515 = vmatprep.subr.bf16.mxu0 0
    %1516 = vmatpush2.bf16.msra.mxu0 %v1305
    %1517 = vmatprep.subr.bf16.mxu0 0
    %1518 = vmatpush2.bf16.msra.mxu0 %v1304
    %1519 = vmatprep.subr.bf16.mxu0 0
    %1520 = vmatpush2.bf16.msra.mxu0 %v1303
    %1521 = vmatprep.subr.bf16.mxu0 0
    %1522 = vmatpush2.bf16.msra.mxu0 %v1302
    %1523 = vmatprep.subr.bf16.mxu0 0
    %1524 = vmatpush2.bf16.msra.mxu0 %v1301
    %1525 = vmatprep.mubr.bf16.mxu0 %v732
    %1526 = vmatmul.mubr.bf16.gmra.mxu0 %v731
    %v1527 = vpop.f32.mrf.mxu0
    %v1528 = vadd.f32 %v1488, %v1527
    %v1529 = vpop.f32.mrf.mxu0
    %v1530 = vpop.f32.mrf.mxu0
    %v1531 = vpop.f32.mrf.mxu0
    %1532 = vdwg.mxu0
    %v1661 = vunpack.c.l.b16 %v733
    %v1662 = vunpack.c.l.b16 %v734
    %v1663 = vunpack.c.l.b16 %v735
    %v1664 = vunpack.c.l.b16 %v736
    %v1665 = vunpack.c.l.b16 %v737
    %v1666 = vunpack.c.l.b16 %v738
    %v1667 = vunpack.c.l.b16 %v739
    %v1668 = vunpack.c.l.b16 %v740
    %v1669 = vunpack.c.l.b16 %v741
    %v1670 = vunpack.c.l.b16 %v742
    %v1671 = vunpack.c.l.b16 %v743
    %v1672 = vunpack.c.l.b16 %v744
    %v1673 = vunpack.c.l.b16 %v745
    %v1674 = vunpack.c.l.b16 %v746
    %v1675 = vunpack.c.l.b16 %v747
    %v1676 = vunpack.c.l.b16 %v748
    %v1677 = vunpack.c.l.b16 %v749
    %v1678 = vunpack.c.l.b16 %v750
    %v1679 = vunpack.c.l.b16 %v751
    %v1680 = vunpack.c.l.b16 %v752
    %v1681 = vunpack.c.l.b16 %v753
    %v1682 = vunpack.c.l.b16 %v754
    %v1683 = vunpack.c.l.b16 %v755
    %v1684 = vunpack.c.l.b16 %v756
    %v1685 = vunpack.c.l.b16 %v757
    %v1686 = vunpack.c.l.b16 %v758
    %v1687 = vunpack.c.l.b16 %v759
    %v1688 = vunpack.c.l.b16 %v760
    %v1689 = vunpack.c.l.b16 %v761
    %v1690 = vunpack.c.l.b16 %v762
    %v1691 = vunpack.c.l.b16 %v763
    %v1692 = vunpack.c.l.b16 %v764
    %v1693 = vunpack.c.l.b16 %v765
    %v1694 = vunpack.c.l.b16 %v766
    %v1695 = vunpack.c.l.b16 %v767
    %v1696 = vunpack.c.l.b16 %v768
    %v1697 = vunpack.c.l.b16 %v769
    %v1698 = vunpack.c.l.b16 %v770
    %v1699 = vunpack.c.l.b16 %v771
    %v1700 = vunpack.c.l.b16 %v772
    %v1701 = vunpack.c.l.b16 %v773
    %v1702 = vunpack.c.l.b16 %v774
    %v1703 = vunpack.c.l.b16 %v775
    %v1704 = vunpack.c.l.b16 %v776
    %v1705 = vunpack.c.l.b16 %v777
    %v1706 = vunpack.c.l.b16 %v778
    %v1707 = vunpack.c.l.b16 %v779
    %v1708 = vunpack.c.l.b16 %v780
    %v1709 = vunpack.c.l.b16 %v781
    %v1710 = vunpack.c.l.b16 %v782
    %v1711 = vunpack.c.l.b16 %v783
    %v1712 = vunpack.c.l.b16 %v784
    %v1713 = vunpack.c.l.b16 %v785
    %v1714 = vunpack.c.l.b16 %v786
    %v1715 = vunpack.c.l.b16 %v787
    %v1716 = vunpack.c.l.b16 %v788
    %v1717 = vunpack.c.l.b16 %v789
    %v1718 = vunpack.c.l.b16 %v790
    %v1719 = vunpack.c.l.b16 %v791
    %v1720 = vunpack.c.l.b16 %v792
    %v1721 = vunpack.c.l.b16 %v793
    %v1722 = vunpack.c.l.b16 %v794
    %v1723 = vunpack.c.l.b16 %v795
    %v1724 = vunpack.c.l.b16 %v796
    %v1725 = vunpack.c.l.b16 %v797
    %v1726 = vunpack.c.l.b16 %v798
    %v1727 = vunpack.c.l.b16 %v799
    %v1728 = vunpack.c.l.b16 %v800
    %v1729 = vunpack.c.l.b16 %v801
    %v1730 = vunpack.c.l.b16 %v802
    %v1731 = vunpack.c.l.b16 %v803
    %v1732 = vunpack.c.l.b16 %v804
    %v1733 = vunpack.c.l.b16 %v805
    %v1734 = vunpack.c.l.b16 %v806
    %v1735 = vunpack.c.l.b16 %v807
    %v1736 = vunpack.c.l.b16 %v808
    %v1737 = vunpack.c.l.b16 %v809
    %v1738 = vunpack.c.l.b16 %v810
    %v1739 = vunpack.c.l.b16 %v811
    %v1740 = vunpack.c.l.b16 %v812
    %v1741 = vunpack.c.l.b16 %v813
    %v1742 = vunpack.c.l.b16 %v814
    %v1743 = vunpack.c.l.b16 %v815
    %v1744 = vunpack.c.l.b16 %v816
    %v1745 = vunpack.c.l.b16 %v817
    %v1746 = vunpack.c.l.b16 %v818
    %v1747 = vunpack.c.l.b16 %v819
    %v1748 = vunpack.c.l.b16 %v820
    %v1749 = vunpack.c.l.b16 %v821
    %v1750 = vunpack.c.l.b16 %v822
    %v1751 = vunpack.c.l.b16 %v823
    %v1752 = vunpack.c.l.b16 %v824
    %v1753 = vunpack.c.l.b16 %v825
    %v1754 = vunpack.c.l.b16 %v826
    %v1755 = vunpack.c.l.b16 %v827
    %v1756 = vunpack.c.l.b16 %v828
    %v1757 = vunpack.c.l.b16 %v829
    %v1758 = vunpack.c.l.b16 %v830
    %v1759 = vunpack.c.l.b16 %v831
    %v1760 = vunpack.c.l.b16 %v832
    %v1761 = vunpack.c.l.b16 %v833
    %v1762 = vunpack.c.l.b16 %v834
    %v1763 = vunpack.c.l.b16 %v835
    %v1764 = vunpack.c.l.b16 %v836
    %v1765 = vunpack.c.l.b16 %v837
    %v1766 = vunpack.c.l.b16 %v838
    %v1767 = vunpack.c.l.b16 %v839
    %v1768 = vunpack.c.l.b16 %v840
    %v1769 = vunpack.c.l.b16 %v841
    %v1770 = vunpack.c.l.b16 %v842
    %v1771 = vunpack.c.l.b16 %v843
    %v1772 = vunpack.c.l.b16 %v844
    %v1773 = vunpack.c.l.b16 %v845
    %v1774 = vunpack.c.l.b16 %v846
    %v1775 = vunpack.c.l.b16 %v847
    %v1776 = vunpack.c.l.b16 %v848
    %v1777 = vunpack.c.l.b16 %v849
    %v1778 = vunpack.c.l.b16 %v850
    %v1779 = vunpack.c.l.b16 %v851
    %v1780 = vunpack.c.l.b16 %v852
    %v1781 = vunpack.c.l.b16 %v853
    %v1782 = vunpack.c.l.b16 %v854
    %v1783 = vunpack.c.l.b16 %v855
    %v1784 = vunpack.c.l.b16 %v856
    %v1785 = vunpack.c.l.b16 %v857
    %v1786 = vunpack.c.l.b16 %v858
    %v1787 = vunpack.c.l.b16 %v859
    %v1788 = vunpack.c.l.b16 %v860
    %v1789 = vpack.c.b16 %v1662, %v1661
    %v1790 = vpack.c.b16 %v1664, %v1663
    %v1791 = vpack.c.b16 %v1666, %v1665
    %v1792 = vpack.c.b16 %v1668, %v1667
    %v1793 = vpack.c.b16 %v1670, %v1669
    %v1794 = vpack.c.b16 %v1672, %v1671
    %v1795 = vpack.c.b16 %v1674, %v1673
    %v1796 = vpack.c.b16 %v1676, %v1675
    %v1797 = vpack.c.b16 %v1678, %v1677
    %v1798 = vpack.c.b16 %v1680, %v1679
    %v1799 = vpack.c.b16 %v1682, %v1681
    %v1800 = vpack.c.b16 %v1684, %v1683
    %v1801 = vpack.c.b16 %v1686, %v1685
    %v1802 = vpack.c.b16 %v1688, %v1687
    %v1803 = vpack.c.b16 %v1690, %v1689
    %v1804 = vpack.c.b16 %v1692, %v1691
    %v1805 = vpack.c.b16 %v1694, %v1693
    %v1806 = vpack.c.b16 %v1696, %v1695
    %v1807 = vpack.c.b16 %v1698, %v1697
    %v1808 = vpack.c.b16 %v1700, %v1699
    %v1809 = vpack.c.b16 %v1702, %v1701
    %v1810 = vpack.c.b16 %v1704, %v1703
    %v1811 = vpack.c.b16 %v1706, %v1705
    %v1812 = vpack.c.b16 %v1708, %v1707
    %v1813 = vpack.c.b16 %v1710, %v1709
    %v1814 = vpack.c.b16 %v1712, %v1711
    %v1815 = vpack.c.b16 %v1714, %v1713
    %v1816 = vpack.c.b16 %v1716, %v1715
    %v1817 = vpack.c.b16 %v1718, %v1717
    %v1818 = vpack.c.b16 %v1720, %v1719
    %v1819 = vpack.c.b16 %v1722, %v1721
    %v1820 = vpack.c.b16 %v1724, %v1723
    %v1821 = vpack.c.b16 %v1726, %v1725
    %v1822 = vpack.c.b16 %v1728, %v1727
    %v1823 = vpack.c.b16 %v1730, %v1729
    %v1824 = vpack.c.b16 %v1732, %v1731
    %v1825 = vpack.c.b16 %v1734, %v1733
    %v1826 = vpack.c.b16 %v1736, %v1735
    %v1827 = vpack.c.b16 %v1738, %v1737
    %v1828 = vpack.c.b16 %v1740, %v1739
    %v1829 = vpack.c.b16 %v1742, %v1741
    %v1830 = vpack.c.b16 %v1744, %v1743
    %v1831 = vpack.c.b16 %v1746, %v1745
    %v1832 = vpack.c.b16 %v1748, %v1747
    %v1833 = vpack.c.b16 %v1750, %v1749
    %v1834 = vpack.c.b16 %v1752, %v1751
    %v1835 = vpack.c.b16 %v1754, %v1753
    %v1836 = vpack.c.b16 %v1756, %v1755
    %v1837 = vpack.c.b16 %v1758, %v1757
    %v1838 = vpack.c.b16 %v1760, %v1759
    %v1839 = vpack.c.b16 %v1762, %v1761
    %v1840 = vpack.c.b16 %v1764, %v1763
    %v1841 = vpack.c.b16 %v1766, %v1765
    %v1842 = vpack.c.b16 %v1768, %v1767
    %v1843 = vpack.c.b16 %v1770, %v1769
    %v1844 = vpack.c.b16 %v1772, %v1771
    %v1845 = vpack.c.b16 %v1774, %v1773
    %v1846 = vpack.c.b16 %v1776, %v1775
    %v1847 = vpack.c.b16 %v1778, %v1777
    %v1848 = vpack.c.b16 %v1780, %v1779
    %v1849 = vpack.c.b16 %v1782, %v1781
    %v1850 = vpack.c.b16 %v1784, %v1783
    %v1851 = vpack.c.b16 %v1786, %v1785
    %v1852 = vpack.c.b16 %v1788, %v1787
    %1917 = vmatprep.subr.bf16.mxu0 0
    %1918 = vmatpush1.bf16.msra.mxu0 %v1796
    %1919 = vmatprep.subr.bf16.mxu0 0
    %1920 = vmatpush1.bf16.msra.mxu0 %v1795
    %1921 = vmatprep.subr.bf16.mxu0 0
    %1922 = vmatpush1.bf16.msra.mxu0 %v1794
    %1923 = vmatprep.subr.bf16.mxu0 0
    %1924 = vmatpush1.bf16.msra.mxu0 %v1793
    %1925 = vmatprep.subr.bf16.mxu0 0
    %1926 = vmatpush1.bf16.msra.mxu0 %v1792
    %1927 = vmatprep.subr.bf16.mxu0 0
    %1928 = vmatpush1.bf16.msra.mxu0 %v1791
    %1929 = vmatprep.subr.bf16.mxu0 0
    %1930 = vmatpush1.bf16.msra.mxu0 %v1790
    %1931 = vmatprep.subr.bf16.mxu0 0
    %1932 = vmatpush1.bf16.msra.mxu0 %v1789
    %1933 = vmatprep.subr.bf16.mxu0 0
    %1934 = vmatpush2.bf16.msra.mxu0 %v1804
    %1935 = vmatprep.subr.bf16.mxu0 0
    %1936 = vmatpush2.bf16.msra.mxu0 %v1803
    %1937 = vmatprep.subr.bf16.mxu0 0
    %1938 = vmatpush2.bf16.msra.mxu0 %v1802
    %1939 = vmatprep.subr.bf16.mxu0 0
    %1940 = vmatpush2.bf16.msra.mxu0 %v1801
    %1941 = vmatprep.subr.bf16.mxu0 0
    %1942 = vmatpush2.bf16.msra.mxu0 %v1800
    %1943 = vmatprep.subr.bf16.mxu0 0
    %1944 = vmatpush2.bf16.msra.mxu0 %v1799
    %1945 = vmatprep.subr.bf16.mxu0 0
    %1946 = vmatpush2.bf16.msra.mxu0 %v1798
    %1947 = vmatprep.subr.bf16.mxu0 0
    %1948 = vmatpush2.bf16.msra.mxu0 %v1797
    %1949 = vmatprep.mubr.bf16.mxu0 %v710
    %1950 = vmatmul.mubr.bf16.gmra.mxu0 %v709
    %v1951 = vpop.f32.mrf.mxu0
    %v1952 = vadd.f32 %v1528, %v1951
    %v1953 = vpop.f32.mrf.mxu0
    %v1954 = vpop.f32.mrf.mxu0
    %v1955 = vpop.f32.mrf.mxu0
    %1956 = vdwg.mxu0
    %1957 = vmatprep.subr.bf16.mxu0 0
    %1958 = vmatpush1.bf16.msra.mxu0 %v1812
    %1959 = vmatprep.subr.bf16.mxu0 0
    %1960 = vmatpush1.bf16.msra.mxu0 %v1811
    %1961 = vmatprep.subr.bf16.mxu0 0
    %1962 = vmatpush1.bf16.msra.mxu0 %v1810
    %1963 = vmatprep.subr.bf16.mxu0 0
    %1964 = vmatpush1.bf16.msra.mxu0 %v1809
    %1965 = vmatprep.subr.bf16.mxu0 0
    %1966 = vmatpush1.bf16.msra.mxu0 %v1808
    %1967 = vmatprep.subr.bf16.mxu0 0
    %1968 = vmatpush1.bf16.msra.mxu0 %v1807
    %1969 = vmatprep.subr.bf16.mxu0 0
    %1970 = vmatpush1.bf16.msra.mxu0 %v1806
    %1971 = vmatprep.subr.bf16.mxu0 0
    %1972 = vmatpush1.bf16.msra.mxu0 %v1805
    %1973 = vmatprep.subr.bf16.mxu0 0
    %1974 = vmatpush2.bf16.msra.mxu0 %v1820
    %1975 = vmatprep.subr.bf16.mxu0 0
    %1976 = vmatpush2.bf16.msra.mxu0 %v1819
    %1977 = vmatprep.subr.bf16.mxu0 0
    %1978 = vmatpush2.bf16.msra.mxu0 %v1818
    %1979 = vmatprep.subr.bf16.mxu0 0
    %1980 = vmatpush2.bf16.msra.mxu0 %v1817
    %1981 = vmatprep.subr.bf16.mxu0 0
    %1982 = vmatpush2.bf16.msra.mxu0 %v1816
    %1983 = vmatprep.subr.bf16.mxu0 0
    %1984 = vmatpush2.bf16.msra.mxu0 %v1815
    %1985 = vmatprep.subr.bf16.mxu0 0
    %1986 = vmatpush2.bf16.msra.mxu0 %v1814
    %1987 = vmatprep.subr.bf16.mxu0 0
    %1988 = vmatpush2.bf16.msra.mxu0 %v1813
    %1989 = vmatprep.mubr.bf16.mxu0 %v712
    %1990 = vmatmul.mubr.bf16.gmra.mxu0 %v711
    %v1991 = vpop.f32.mrf.mxu0
    %v1992 = vadd.f32 %v1952, %v1991
    %v1993 = vpop.f32.mrf.mxu0
    %v1994 = vpop.f32.mrf.mxu0
    %v1995 = vpop.f32.mrf.mxu0
    %1996 = vdwg.mxu0
    %1997 = vmatprep.subr.bf16.mxu0 0
    %1998 = vmatpush1.bf16.msra.mxu0 %v1828
    %1999 = vmatprep.subr.bf16.mxu0 0
    %2000 = vmatpush1.bf16.msra.mxu0 %v1827
    %2001 = vmatprep.subr.bf16.mxu0 0
    %2002 = vmatpush1.bf16.msra.mxu0 %v1826
    %2003 = vmatprep.subr.bf16.mxu0 0
    %2004 = vmatpush1.bf16.msra.mxu0 %v1825
    %2005 = vmatprep.subr.bf16.mxu0 0
    %2006 = vmatpush1.bf16.msra.mxu0 %v1824
    %2007 = vmatprep.subr.bf16.mxu0 0
    %2008 = vmatpush1.bf16.msra.mxu0 %v1823
    %2009 = vmatprep.subr.bf16.mxu0 0
    %2010 = vmatpush1.bf16.msra.mxu0 %v1822
    %2011 = vmatprep.subr.bf16.mxu0 0
    %2012 = vmatpush1.bf16.msra.mxu0 %v1821
    %2013 = vmatprep.subr.bf16.mxu0 0
    %2014 = vmatpush2.bf16.msra.mxu0 %v1836
    %2015 = vmatprep.subr.bf16.mxu0 0
    %2016 = vmatpush2.bf16.msra.mxu0 %v1835
    %2017 = vmatprep.subr.bf16.mxu0 0
    %2018 = vmatpush2.bf16.msra.mxu0 %v1834
    %2019 = vmatprep.subr.bf16.mxu0 0
    %2020 = vmatpush2.bf16.msra.mxu0 %v1833
    %2021 = vmatprep.subr.bf16.mxu0 0
    %2022 = vmatpush2.bf16.msra.mxu0 %v1832
    %2023 = vmatprep.subr.bf16.mxu0 0
    %2024 = vmatpush2.bf16.msra.mxu0 %v1831
    %2025 = vmatprep.subr.bf16.mxu0 0
    %2026 = vmatpush2.bf16.msra.mxu0 %v1830
    %2027 = vmatprep.subr.bf16.mxu0 0
    %2028 = vmatpush2.bf16.msra.mxu0 %v1829
    %2029 = vmatprep.mubr.bf16.mxu0 %v714
    %2030 = vmatmul.mubr.bf16.gmra.mxu0 %v713
    %v2031 = vpop.f32.mrf.mxu0
    %v2032 = vadd.f32 %v1992, %v2031
    %v2033 = vpop.f32.mrf.mxu0
    %v2034 = vpop.f32.mrf.mxu0
    %v2035 = vpop.f32.mrf.mxu0
    %2036 = vdwg.mxu0
    %2037 = vmatprep.subr.bf16.mxu0 0
    %2038 = vmatpush1.bf16.msra.mxu0 %v1844
    %2039 = vmatprep.subr.bf16.mxu0 0
    %2040 = vmatpush1.bf16.msra.mxu0 %v1843
    %2041 = vmatprep.subr.bf16.mxu0 0
    %2042 = vmatpush1.bf16.msra.mxu0 %v1842
    %2043 = vmatprep.subr.bf16.mxu0 0
    %2044 = vmatpush1.bf16.msra.mxu0 %v1841
    %2045 = vmatprep.subr.bf16.mxu0 0
    %2046 = vmatpush1.bf16.msra.mxu0 %v1840
    %2047 = vmatprep.subr.bf16.mxu0 0
    %2048 = vmatpush1.bf16.msra.mxu0 %v1839
    %2049 = vmatprep.subr.bf16.mxu0 0
    %2050 = vmatpush1.bf16.msra.mxu0 %v1838
    %2051 = vmatprep.subr.bf16.mxu0 0
    %2052 = vmatpush1.bf16.msra.mxu0 %v1837
    %2053 = vmatprep.subr.bf16.mxu0 0
    %2054 = vmatpush2.bf16.msra.mxu0 %v1852
    %2055 = vmatprep.subr.bf16.mxu0 0
    %2056 = vmatpush2.bf16.msra.mxu0 %v1851
    %2057 = vmatprep.subr.bf16.mxu0 0
    %2058 = vmatpush2.bf16.msra.mxu0 %v1850
    %2059 = vmatprep.subr.bf16.mxu0 0
    %2060 = vmatpush2.bf16.msra.mxu0 %v1849
    %2061 = vmatprep.subr.bf16.mxu0 0
    %2062 = vmatpush2.bf16.msra.mxu0 %v1848
    %2063 = vmatprep.subr.bf16.mxu0 0
    %2064 = vmatpush2.bf16.msra.mxu0 %v1847
    %2065 = vmatprep.subr.bf16.mxu0 0
    %2066 = vmatpush2.bf16.msra.mxu0 %v1846
    %2067 = vmatprep.subr.bf16.mxu0 0
    %2068 = vmatpush2.bf16.msra.mxu0 %v1845
    %2069 = vmatprep.mubr.bf16.mxu0 %v716
    %2070 = vmatmul.mubr.bf16.gmra.mxu0 %v715
    %v2071 = vpop.f32.mrf.mxu0
    %v2072 = vadd.f32 %v2032, %v2071
    %v2073 = vpop.f32.mrf.mxu0
    %v2074 = vpop.f32.mrf.mxu0
    %v2075 = vpop.f32.mrf.mxu0
    %2076 = vdwg.mxu0
    %v2077 = vld [vmem:[%s8] sm:$0x1]
    %v2079 = vlaneseq
    %v2080 = vshrl.u32 %v2079, 7
    %v2081 = vsub.s32 0, %v2080
    %v2082 = vrot.slane %v2077, %v2081
    %v2084 = vadd.f32 %v2072, %v2082
    %2085 = vst [vmem:[%s9] sm:$0xff] %v2084
    // Predicated region
    $region54: #{two_inputs_forward.1} parent=1 // pred_check
      _
    $region55: #{two_inputs_forward.1} parent=1 // pred_check_branch
      %2087 = sbr.rel (0) target = $region57
    $region56: #{two_inputs_forward.1} parent=1 // pred_region
      _
    $region57: #{two_inputs_forward.1} parent=1 // pred_fallthru
      _
    // Predicated region
    $region58: #{two_inputs_forward.1} parent=1 // pred_check
      _
    $region59: #{two_inputs_forward.1} parent=1 // pred_check_branch
      %2089 = sbr.rel (0) target = $region61
    $region60: #{two_inputs_forward.1} parent=1 // pred_region
      _
    $region61: #{two_inputs_forward.1} parent=1 // pred_fallthru
      _
    %2090 = vsyncpa [#allocation3], 1
    %2091 = vsyncpa [#allocation5], 1
    %2092 = vsyncpa [#allocation8], 1

</llo_original>
